<compile_context>
chip_gen: v5e
topology: v5e:2x2
jax: 0.10.0
libtpu: 0.0.40
codegen_flags: <defaults>
</compile_context>

<pallas_src>
import functools

import numpy as np
import jax
import jax.numpy as jnp
from jax.experimental import pallas as pl
from jax.experimental.pallas import tpu as pltpu


# ----------------------------------------------------------------------------
# Generation-aware VMEM budget / tiling helpers
# ----------------------------------------------------------------------------
def _round_up(x, m):
    return (x + m - 1) // m * m


def _cdiv(a, b):
    return (a + b - 1) // b


@functools.lru_cache(maxsize=None)
def _vmem_budget():
    """~3/4 of per-core VMEM, capped at 100 MiB (v5e/v6e: ~96 MiB, v7x: 48 MiB)."""
    cap = None
    try:
        info = pltpu.get_tpu_info()
        for name in ("vmem_capacity_bytes", "vmem_size_bytes", "vmem_bytes"):
            v = getattr(info, name, None)
            if v:
                cap = int(v)
                break
    except Exception:
        cap = None
    if not cap:
        cap = 64 * 1024 * 1024          # conservative fallback (v7x per-TC)
    return max(32 * 1024 * 1024, min(cap * 3 // 4, 100 * 1024 * 1024))


def _choose_tm(M, per_row_bytes, fixed_bytes, budget, cap=512):
    """Largest M tile (multiple of 8, <= cap) whose working set fits the budget."""
    tm = min(cap, _round_up(M, 8))
    while tm > 8 and fixed_bytes + tm * per_row_bytes > budget:
        tm = max(8, _round_up(tm // 2, 8))
    return tm


def _ensure_two_blocks(M, tm, n_col_blocks):
    """v7x megacore: make sure the 'parallel' (i, j) grid has >= 2 entries."""
    if n_col_blocks >= 2 or M <= 8:
        return tm
    if _cdiv(M, tm) >= 2:
        return tm
    return max(8, _round_up(_cdiv(M, 2), 8))


# ----------------------------------------------------------------------------
# Pallas kernels
# ----------------------------------------------------------------------------
def _mm_bias_relu_kernel(x_ref, w_ref, b_ref, o_ref):
    """out = relu(x @ w + b); full K resident in VMEM (no K grid axis)."""
    acc = jnp.dot(x_ref[...], w_ref[...], preferred_element_type=jnp.float32)
    o_ref[...] = jnp.maximum(acc + b_ref[...], 0.0).astype(o_ref.dtype)


def _mm_bias_relu_add_kernel(x_ref, w_ref, b_ref, r_ref, o_ref):
    """out = relu(x @ w + b) + r   (bf16 residual, added in f32)."""
    acc = jnp.dot(x_ref[...], w_ref[...], preferred_element_type=jnp.float32)
    o_ref[...] = (jnp.maximum(acc + b_ref[...], 0.0)
                  + r_ref[...].astype(jnp.float32)).astype(o_ref.dtype)


def _dual_mm_bias_relu_kernel(x1_ref, w1_ref, b1_ref, x2_ref, w2_ref, b2_ref,
                              o_ref):
    """out = relu(x1 @ w1 + b1) + relu(x2 @ w2 + b2)  (conv3 + downsample)."""
    main = jnp.dot(x1_ref[...], w1_ref[...], preferred_element_type=jnp.float32)
    short = jnp.dot(x2_ref[...], w2_ref[...], preferred_element_type=jnp.float32)
    o_ref[...] = (jnp.maximum(main + b1_ref[...], 0.0)
                  + jnp.maximum(short + b2_ref[...], 0.0)).astype(o_ref.dtype)


def _make_conv2_kernel(tap_plan, Ho, Wo, cblk):
    """3x3 grouped-conv kernel: 9 in-kernel taps, diagonal weight blocks only."""
    def kernel(x_ref, w_ref, b_ref, o_ref, acc_ref):
        acc_ref[...] = jnp.zeros_like(acc_ref)
        for t, (pi, oh, ow) in enumerate(tap_plan):
            win = x_ref[0, pi, oh:oh + Ho, ow:ow + Wo, :]
            acc_ref[...] += jnp.dot(win.reshape(Ho * Wo, cblk), w_ref[0, t],
                                    preferred_element_type=jnp.float32)
        out = jnp.maximum(acc_ref[...] + b_ref[...], 0.0)
        o_ref[...] = out.reshape(1, Ho, Wo, cblk).astype(o_ref.dtype)
    return kernel


# ----------------------------------------------------------------------------
# pallas_call wrappers
# ----------------------------------------------------------------------------
def fused_mm_bn_relu(x, w, bias, *, residual=None, out_dtype=jnp.bfloat16):
    """relu(x @ w + bias) [+ residual] as one tiled Pallas kernel.

    x:[M,K], w:[K,C] (BN scale folded), bias:[C].  K, C are multiples of 128.
    K is kept fully VMEM-resident (ResNeXt K <= 2048), so the grid is (M, C)
    only and the weight panel is not re-streamed per K step.
    """
    M, K = x.shape
    Kw, C = w.shape
    assert K == Kw and K % 128 == 0 and C % 128 == 0
    budget = _vmem_budget()
    tn = 256 if C % 256 == 0 else 128
    ob = jnp.dtype(out_dtype).itemsize
    per_row = 2 * K * 2 + 2 * tn * ob + (2 * tn * 2 if residual is not None else 0)
    fixed = 2 * K * tn * 2 + 2 * tn * 4 + (1 << 20)
    tm = _choose_tm(M, per_row, fixed, budget)
    tm = _ensure_two_blocks(M, tm, C // tn)
    Mp = _round_up(M, tm)

    def pad_rows(a):
        return a if Mp == M else jnp.pad(a, ((0, Mp - M), (0, 0)))

    x_p = pad_rows(x.astype(jnp.bfloat16))
    b_p = bias.reshape(1, C).astype(jnp.float32)

    in_specs = [
        pl.BlockSpec((tm, K), lambda i, j: (i, 0)),
        pl.BlockSpec((K, tn), lambda i, j: (0, j)),
        pl.BlockSpec((1, tn), lambda i, j: (0, j)),
    ]
    args = [x_p, w.astype(jnp.bfloat16), b_p]
    kernel = _mm_bias_relu_kernel
    bytes_accessed = Mp * K * 2 + K * C * 2 + Mp * C * ob + C * 4
    if residual is not None:
        in_specs.append(pl.BlockSpec((tm, tn), lambda i, j: (i, j)))
        args.append(pad_rows(residual.astype(jnp.bfloat16)))     # bf16 residual
        kernel = _mm_bias_relu_add_kernel
        bytes_accessed += Mp * C * 2

    out = pl.pallas_call(
        kernel,
        out_shape=jax.ShapeDtypeStruct((Mp, C), out_dtype),
        grid=(Mp // tm, C // tn),
        in_specs=in_specs,
        out_specs=pl.BlockSpec((tm, tn), lambda i, j: (i, j)),
        compiler_params=pltpu.CompilerParams(
            dimension_semantics=("parallel", "parallel"),
            vmem_limit_bytes=budget),
        cost_estimate=pl.CostEstimate(flops=2 * Mp * K * C, transcendentals=0,
                                      bytes_accessed=bytes_accessed),
    )(*args)
    return out if Mp == M else out[:M]


def fused_dual_mm_bn_relu(x_main, w_main, b_main, x_short, w_short, b_short,
                          *, out_dtype=jnp.bfloat16):
    """relu(x_main @ w_main + b_main) + relu(x_short @ w_short + b_short).

    Four separate inputs (no K-concatenation materialized in HBM); both K dims
    are fully VMEM-resident.
    """
    M, K1 = x_main.shape
    Ms, K2 = x_short.shape
    assert M == Ms
    _, C = w_main.shape
    assert w_short.shape[1] == C and C % 128 == 0
    budget = _vmem_budget()
    tn = 256 if C % 256 == 0 else 128
    ob = jnp.dtype(out_dtype).itemsize
    per_row = 2 * (K1 + K2) * 2 + 2 * tn * ob
    fixed = 2 * (K1 + K2) * tn * 2 + 4 * tn * 4 + (1 << 20)
    tm = _choose_tm(M, per_row, fixed, budget)
    tm = _ensure_two_blocks(M, tm, C // tn)
    Mp = _round_up(M, tm)

    def pad_rows(a):
        return a if Mp == M else jnp.pad(a, ((0, Mp - M), (0, 0)))

    out = pl.pallas_call(
        _dual_mm_bias_relu_kernel,
        out_shape=jax.ShapeDtypeStruct((Mp, C), out_dtype),
        grid=(Mp // tm, C // tn),
        in_specs=[
            pl.BlockSpec((tm, K1), lambda i, j: (i, 0)),
            pl.BlockSpec((K1, tn), lambda i, j: (0, j)),
            pl.BlockSpec((1, tn), lambda i, j: (0, j)),
            pl.BlockSpec((tm, K2), lambda i, j: (i, 0)),
            pl.BlockSpec((K2, tn), lambda i, j: (0, j)),
            pl.BlockSpec((1, tn), lambda i, j: (0, j)),
        ],
        out_specs=pl.BlockSpec((tm, tn), lambda i, j: (i, j)),
        compiler_params=pltpu.CompilerParams(
            dimension_semantics=("parallel", "parallel"),
            vmem_limit_bytes=budget),
        cost_estimate=pl.CostEstimate(
            flops=2 * Mp * (K1 + K2) * C, transcendentals=0,
            bytes_accessed=(Mp * (K1 + K2) * 2 + (K1 + K2) * C * 2
                            + Mp * C * ob)),
    )(pad_rows(x_main.astype(jnp.bfloat16)), w_main.astype(jnp.bfloat16),
      b_main.reshape(1, C).astype(jnp.float32),
      pad_rows(x_short.astype(jnp.bfloat16)), w_short.astype(jnp.bfloat16),
      b_short.reshape(1, C).astype(jnp.float32))
    return out if Mp == M else out[:M]


def _conv2_cblock(c_mid, c_mid_p, groups):
    """Channel-block size for which the grouped 3x3 conv is exactly block-diagonal."""
    c_pg = max(1, c_mid // groups)
    for cand in (256, 128):                 # prefer 256 for the 256x256 MXU
        if c_mid % cand == 0 and cand % c_pg == 0:
            return cand
    return c_mid_p                          # single block covers everything


def _conv2_planes(h1, stride):
    """Spatially-padded h1, split into stride-parity planes (contiguous taps)."""
    N, H, W, C = h1.shape
    Ho = (H + 2 - 3) // stride + 1
    Wo = (W + 2 - 3) // stride + 1
    padded = jnp.pad(h1, ((0, 0), (1, 1), (1, 1), (0, 0)))
    if stride == 1:
        planes = padded[:, None]                      # (N, 1, H+2, W+2, C)
        tap_plan = [(0, kh, kw) for kh in range(3) for kw in range(3)]
        return planes, tap_plan, Ho, Wo
    if stride != 2:
        raise NotImplementedError("TODO(synk): conv2 stride must be 1 or 2")
    Hp, Wp = 2 * (Ho + 1), 2 * (Wo + 1)
    padded = jnp.pad(padded, ((0, 0), (0, Hp - (H + 2)), (0, Wp - (W + 2)), (0, 0)))
    planes = padded.reshape(N, Ho + 1, 2, Wo + 1, 2, C)
    planes = planes.transpose(0, 2, 4, 1, 3, 5).reshape(N, 4, Ho + 1, Wo + 1, C)
    tap_plan = [(2 * (kh % 2) + (kw % 2), kh // 2, kw // 2)
                for kh in range(3) for kw in range(3)]
    return planes, tap_plan, Ho, Wo


def grouped_conv3x3_bn_relu(h1, w2_taps, bias, *, stride, groups, c_mid):
    """3x3 grouped conv + BN(bias) + ReLU, no im2col, diagonal weight blocks.

    h1: (N, H, W, Cp) bf16; w2_taps: (9, Cp, Cp) BN-scale-folded dense weight;
    bias: (Cp,).  Returns (N, Ho, Wo, Cp) bf16.
    """
    N, H, W, Cp = h1.shape
    budget = _vmem_budget()
    cblk = _conv2_cblock(c_mid, Cp, groups)
    nblk = Cp // cblk
    planes, tap_plan, Ho, Wo = _conv2_planes(h1, stride)
    _, P, Hs, Ws, _ = planes.shape

    # Diagonal (per-group-aligned) weight blocks: (nblk, 9, cblk, cblk).
    wb = w2_taps.reshape(9, nblk, cblk, nblk, cblk)
    idx = jnp.arange(nblk)
    wb = wb[:, idx, :, idx, :]

    out = pl.pallas_call(
        _make_conv2_kernel(tap_plan, Ho, Wo, cblk),
        out_shape=jax.ShapeDtypeStruct((N, Ho, Wo, Cp), jnp.bfloat16),
        grid=(N, nblk),
        in_specs=[
            pl.BlockSpec((1, P, Hs, Ws, cblk), lambda n, j: (n, 0, 0, 0, j)),
            pl.BlockSpec((1, 9, cblk, cblk), lambda n, j: (j, 0, 0, 0)),
            pl.BlockSpec((1, cblk), lambda n, j: (0, j)),
        ],
        out_specs=pl.BlockSpec((1, Ho, Wo, cblk), lambda n, j: (n, 0, 0, j)),
        scratch_shapes=[pltpu.VMEM((Ho * Wo, cblk), jnp.float32)],
        compiler_params=pltpu.CompilerParams(
            dimension_semantics=("parallel", "parallel"),
            vmem_limit_bytes=budget),
        cost_estimate=pl.CostEstimate(
            flops=2 * 9 * N * Ho * Wo * cblk * Cp, transcendentals=0,
            bytes_accessed=(N * P * Hs * Ws * Cp * 2 + nblk * 9 * cblk * cblk * 2
                            + N * Ho * Wo * Cp * 2)),
    )(planes.astype(jnp.bfloat16), wb.astype(jnp.bfloat16),
      bias.reshape(1, Cp).astype(jnp.float32))
    return out


# ----------------------------------------------------------------------------
# Glue: grouped-conv weights -> dense matmul weights, BN folding
# ----------------------------------------------------------------------------
def _grouped_1x1_to_dense(w, groups):
    # w: [Cout, Cin_pg, 1, 1] -> dense [Cin, Cout]  (block diagonal)
    w = np.asarray(w)
    c_out, c_in_pg = w.shape[0], w.shape[1]
    c_in = c_in_pg * groups
    c_out_pg = c_out // groups
    dense = np.zeros((c_in, c_out), np.float32)
    w2 = w[:, :, 0, 0]
    for g in range(groups):
        dense[g * c_in_pg:(g + 1) * c_in_pg, g * c_out_pg:(g + 1) * c_out_pg] = \
            w2[g * c_out_pg:(g + 1) * c_out_pg, :].T
    return jnp.asarray(dense)


def _grouped_3x3_to_dense(w, groups):
    # w: [Cout, Cin_pg, 3, 3] -> dense [9*Cin, Cout], flat = (kh*3+kw)*Cin + cin
    w = np.asarray(w)
    c_out, c_in_pg, kh, kw = w.shape
    c_in = c_in_pg * groups
    c_out_pg = c_out // groups
    dense = np.zeros((kh, kw, c_in, c_out), np.float32)
    for g in range(groups):
        blk = np.transpose(w[g * c_out_pg:(g + 1) * c_out_pg], (2, 3, 1, 0))
        dense[:, :, g * c_in_pg:(g + 1) * c_in_pg,
              g * c_out_pg:(g + 1) * c_out_pg] = blk
    return jnp.asarray(dense.reshape(kh * kw * c_in, c_out))


def _full_1x1_to_dense(w):
    return jnp.asarray(np.asarray(w)[:, :, 0, 0].T.astype(np.float32))


def _bn_fold(gamma, beta, mean, var, eps=1e-5):
    s = gamma / jnp.sqrt(var + eps)
    return s, beta - mean * s


# ----------------------------------------------------------------------------
# Forward pass (Pallas path)
# ----------------------------------------------------------------------------
def _forward_impl(x_nchw, p, *, in_channels, out_channels, stride,
                  groups=32, expansion=4):
    c_mid = groups * int(expansion * out_channels / 64)
    c_out = out_channels * expansion
    c_in_p = _round_up(in_channels, 128)
    c_mid_p = _round_up(c_mid, 128)
    c_out_p = _round_up(c_out, 128)

    x = jnp.transpose(x_nchw, (0, 2, 3, 1))                        # NCHW -> NHWC
    N, H, W, _ = x.shape
    x_p = jnp.pad(x, ((0, 0), (0, 0), (0, 0),
                      (0, c_in_p - in_channels))).astype(jnp.bfloat16)

    def pad_c(v, cp):
        return jnp.pad(v, (0, cp - v.shape[0]))

    # ---- conv1: 1x1 grouped conv + BN + ReLU (block-diag dense matmul) ----
    s1, b1 = _bn_fold(p['bn1_g'], p['bn1_b'], p['bn1_m'], p['bn1_v'])
    w1 = jnp.pad(p['w1_dense'] * s1[None, :],
                 ((0, c_in_p - in_channels), (0, c_mid_p - c_mid)))
    h1 = fused_mm_bn_relu(x_p.reshape(N * H * W, c_in_p), w1, pad_c(b1, c_mid_p))
    h1 = h1.reshape(N, H, W, c_mid_p)                               # bf16

    # ---- conv2: 3x3 grouped conv (stride, pad=1) + BN + ReLU, no im2col ----
    s2, b2 = _bn_fold(p['bn2_g'], p['bn2_b'], p['bn2_m'], p['bn2_v'])
    w2 = p['w2_dense'].reshape(9, c_mid, c_mid) * s2[None, None, :]
    w2 = jnp.pad(w2, ((0, 0), (0, c_mid_p - c_mid), (0, c_mid_p - c_mid)))
    h2 = grouped_conv3x3_bn_relu(h1, w2, pad_c(b2, c_mid_p),
                                 stride=stride, groups=groups, c_mid=c_mid)
    _, Ho, Wo, _ = h2.shape
    M2 = N * Ho * Wo
    h2_2d = h2.reshape(M2, c_mid_p)                                 # free merge

    # ---- conv3 (+ shortcut), fused in one kernel ----
    s3, b3 = _bn_fold(p['bn3_g'], p['bn3_b'], p['bn3_m'], p['bn3_v'])
    w3 = jnp.pad(p['w3_dense'] * s3[None, :],
                 ((0, c_mid_p - c_mid), (0, c_out_p - c_out)))
    b3p = pad_c(b3, c_out_p)

    if stride != 1 or in_channels != c_out:
        # Downsample shortcut (1x1 conv + BN + ReLU) fused into the conv3 kernel.
        sd, bd = _bn_fold(p['bnd_g'], p['bnd_b'], p['bnd_m'], p['bnd_v'])
        wd = jnp.pad(p['wd_dense'] * sd[None, :],
                     ((0, c_in_p - in_channels), (0, c_out_p - c_out)))
        xs = x_p[:, ::stride, ::stride, :].reshape(M2, c_in_p)
        out2d = fused_dual_mm_bn_relu(h2_2d, w3, b3p,
                                      xs, wd, pad_c(bd, c_out_p),
                                      out_dtype=jnp.bfloat16)
    else:
        # Identity shortcut (c_in_p == c_out_p): bf16 residual added in epilogue.
        res = x_p.reshape(M2, c_in_p)
        out2d = fused_mm_bn_relu(h2_2d, w3, b3p, residual=res,
                                 out_dtype=jnp.bfloat16)

    out = out2d[:, :c_out].reshape(N, Ho, Wo, c_out)
    # One fused slice + transpose + cast pass back to the module's NCHW contract.
    return jnp.transpose(out, (0, 3, 1, 2)).astype(x_nchw.dtype)


resnext_bottleneck_forward = jax.jit(
    _forward_impl,
    static_argnames=('in_channels', 'out_channels', 'stride', 'groups', 'expansion'))


# ----------------------------------------------------------------------------
# Deterministic parameter construction
# ----------------------------------------------------------------------------
def init_params(key, in_channels, out_channels, groups=32, expansion=4):
    c_mid = groups * int(expansion * out_channels / 64)
    c_out = out_channels * expansion
    ks = list(jax.random.split(key, 8))

    def conv_w(k, shape):
        fan_in = shape[1] * shape[2] * shape[3]
        return jax.random.normal(k, shape, jnp.float32) * (2.0 / fan_in) ** 0.5

    def bn(k, c):
        k1, k2, k3, k4 = jax.random.split(k, 4)
        return (jax.random.uniform(k1, (c,), jnp.float32, 0.5, 1.5),
                jax.random.normal(k2, (c,), jnp.float32) * 0.1,
                jax.random.normal(k3, (c,), jnp.float32) * 0.1,
                jax.random.uniform(k4, (c,), jnp.float32, 0.5, 1.5))

    w1 = conv_w(ks[0], (c_mid, in_channels // groups, 1, 1))
    w2 = conv_w(ks[1], (c_mid, c_mid // groups, 3, 3))
    w3 = conv_w(ks[2], (c_out, c_mid, 1, 1))
    wd = conv_w(ks[3], (c_out, in_channels, 1, 1))
    bn1 = bn(ks[4], c_mid)
    bn2 = bn(ks[5], c_mid)
    bn3 = bn(ks[6], c_out)
    bnd = bn(ks[7], c_out)

    p = {
        'w1': w1, 'w2': w2, 'w3': w3, 'wd': wd,
        'w1_dense': _grouped_1x1_to_dense(w1, groups),
        'w2_dense': _grouped_3x3_to_dense(w2, groups),
        'w3_dense': _full_1x1_to_dense(w3),
        'wd_dense': _full_1x1_to_dense(wd),
    }
    for name, (g, b, m, v) in (('bn1', bn1), ('bn2', bn2), ('bn3', bn3), ('bnd', bnd)):
        p[f'{name}_g'], p[f'{name}_b'], p[f'{name}_m'], p[f'{name}_v'] = g, b, m, v
    return p


# ----------------------------------------------------------------------------
# Pure-JAX (XLA conv) reference for correctness checking
# ----------------------------------------------------------------------------
def ref_forward(x, p, in_channels, out_channels, stride, groups=32, expansion=4):
    c_out = out_channels * expansion

    def conv(x, w, s, g, pad):
        return jax.lax.conv_general_dilated(
            x, w, (s, s), [(pad, pad), (pad, pad)],
            dimension_numbers=('NCHW', 'OIHW', 'NCHW'),
            feature_group_count=g, precision=jax.lax.Precision.HIGHEST)

    def bn_relu(x, g, b, m, v):
        s = g / jnp.sqrt(v + 1e-5)
        bb = b - m * s
        return jnp.maximum(x * s[None, :, None, None] + bb[None, :, None, None], 0.0)

    out = bn_relu(conv(x, p['w1'], 1, groups, 0),
                  p['bn1_g'], p['bn1_b'], p['bn1_m'], p['bn1_v'])
    out = bn_relu(conv(out, p['w2'], stride, groups, 1),
                  p['bn2_g'], p['bn2_b'], p['bn2_m'], p['bn2_v'])
    out = bn_relu(conv(out, p['w3'], 1, 1, 0),
                  p['bn3_g'], p['bn3_b'], p['bn3_m'], p['bn3_v'])
    if stride != 1 or in_channels != c_out:
        sc = bn_relu(conv(x, p['wd'], stride, 1, 0),
                     p['bnd_g'], p['bnd_b'], p['bnd_m'], p['bnd_v'])
    else:
        sc = x
    return sc + out


if __name__ == "__main__":
    key = jax.random.PRNGKey(0)
    k_x, k_p, k_x2, k_p2 = jax.random.split(key, 4)

    # Config A: in=64, out=32, stride=2 -> downsample branch (fused dual kernel).
    in_c, out_c, stride = 64, 32, 2
    x = jax.random.normal(k_x, (2, in_c, 8, 8), jnp.float32)
    params = init_params(k_p, in_c, out_c)
    out = resnext_bottleneck_forward(x, params, in_channels=in_c,
                                     out_channels=out_c, stride=stride)
    out = jax.block_until_ready(out)
    assert out.shape == (2, out_c * 4, 4, 4), out.shape
    ref = jax.block_until_ready(ref_forward(x, params, in_c, out_c, stride))
    rel_err = float(jnp.max(jnp.abs(out - ref))) / (float(jnp.max(jnp.abs(ref))) + 1e-6)
    assert np.isfinite(rel_err) and rel_err < 3e-2, f"config A error too large: {rel_err}"

    # Config B: in=128, out=32, stride=1 -> identity shortcut (residual-add kernel).
    in_c2, out_c2, stride2 = 128, 32, 1
    x2 = jax.random.normal(k_x2, (2, in_c2, 8, 8), jnp.float32)
    params2 = init_params(k_p2, in_c2, out_c2)
    out2 = resnext_bottleneck_forward(x2, params2, in_channels=in_c2,
                                      out_channels=out_c2, stride=stride2)
    out2 = jax.block_until_ready(out2)
    assert out2.shape == (2, out_c2 * 4, 8, 8), out2.shape
    ref2 = jax.block_until_ready(ref_forward(x2, params2, in_c2, out_c2, stride2))
    rel_err2 = float(jnp.max(jnp.abs(out2 - ref2))) / (float(jnp.max(jnp.abs(ref2))) + 1e-6)
    assert np.isfinite(rel_err2) and rel_err2 < 3e-2, f"config B error too large: {rel_err2}"

    print("KERNEL_OK")
</pallas_src>

<mosaic_0001>
module attributes {stable_mosaic.version = 11 : i64} {
  func.func @_mm_bias_relu_kernel(%arg0: i32, %arg1: i32, %arg2: memref<64x128xbf16, #tpu.memory_space<vmem>>, %arg3: memref<128x128xbf16, #tpu.memory_space<vmem>>, %arg4: memref<1x128xf32, #tpu.memory_space<vmem>>, %arg5: memref<64x128xbf16, #tpu.memory_space<vmem>>) attributes {dimension_semantics = [#tpu.dimension_semantics<parallel>, #tpu.dimension_semantics<parallel>], iteration_bounds = array<i64: 2, 1>, scalar_prefetch = 0 : i64, scratch_operands = 0 : i64, tpu.core_type = #tpu.core_type<tc>, window_params = [{transform_indices = @transform_0, window_bounds = array<i64: 64, 128>}, {transform_indices = @transform_1, window_bounds = array<i64: 128, 128>}, {transform_indices = @transform_2, window_bounds = array<i64: 1, 128>}, {transform_indices = @transform_3, window_bounds = array<i64: 64, 128>}]} {
    %c0 = arith.constant 0 : index
    %c0_0 = arith.constant 0 : index
    %0 = vector.load %arg2[%c0, %c0_0] : memref<64x128xbf16, #tpu.memory_space<vmem>>, vector<64x128xbf16>
    %c0_1 = arith.constant 0 : index
    %c0_2 = arith.constant 0 : index
    %1 = vector.load %arg3[%c0_1, %c0_2] : memref<128x128xbf16, #tpu.memory_space<vmem>>, vector<128x128xbf16>
    %cst = arith.constant dense<0.000000e+00> : vector<64x128xf32>
    %2 = tpu.matmul %0, %1, %cst {dimension_numbers = #tpu.dot_dimension_numbers<[1], [0], [0], [1], [0, 0, 1, 1], [], []>} : vector<64x128xbf16>, vector<128x128xbf16>, vector<64x128xf32> -> vector<64x128xf32>
    %c0_3 = arith.constant 0 : index
    %c0_4 = arith.constant 0 : index
    %3 = vector.load %arg4[%c0_3, %c0_4] : memref<1x128xf32, #tpu.memory_space<vmem>>, vector<1x128xf32>
    %4 = vector.broadcast %3 : vector<1x128xf32> to vector<64x128xf32>
    %5 = arith.addf %2, %4 : vector<64x128xf32>
    %cst_5 = arith.constant 0.000000e+00 : f32
    %6 = vector.broadcast %cst_5 : f32 to vector<64x128xf32>
    %7 = arith.maximumf %5, %6 : vector<64x128xf32>
    %8 = arith.truncf %7 : vector<64x128xf32> to vector<64x128xbf16>
    %c0_6 = arith.constant 0 : index
    %c0_7 = arith.constant 0 : index
    %9 = vector.load %arg5[%c0_6, %c0_7] : memref<64x128xbf16, #tpu.memory_space<vmem>>, vector<64x128xbf16>
    tpu.vector_store %arg5[%c0_6, %c0_7], %8 {strides = array<i32>} : memref<64x128xbf16, #tpu.memory_space<vmem>>, vector<64x128xbf16>,
    return
  }
  func.func @transform_0(%arg0: i32, %arg1: i32) -> (i32, i32) {
    %c0_i32 = arith.constant 0 : i32
    %c0_i32_0 = arith.constant 0 : i32
    return %arg0, %c0_i32 : i32, i32
  }
  func.func @transform_1(%arg0: i32, %arg1: i32) -> (i32, i32) {
    %c0_i32 = arith.constant 0 : i32
    %c0_i32_0 = arith.constant 0 : i32
    return %c0_i32, %arg1 : i32, i32
  }
  func.func @transform_2(%arg0: i32, %arg1: i32) -> (i32, i32) {
    %c0_i32 = arith.constant 0 : i32
    %c0_i32_0 = arith.constant 0 : i32
    return %c0_i32, %arg1 : i32, i32
  }
  func.func @transform_3(%arg0: i32, %arg1: i32) -> (i32, i32) {
    %c0_i32 = arith.constant 0 : i32
    return %arg0, %arg1 : i32, i32
  }
}

module attributes {stable_mosaic.version = 11 : i64} {
  func.func @kernel(%arg0: i32, %arg1: i32, %arg2: memref<1x4x5x5x128xbf16, #tpu.memory_space<vmem>>, %arg3: memref<1x9x128x128xbf16, #tpu.memory_space<vmem>>, %arg4: memref<1x128xf32, #tpu.memory_space<vmem>>, %arg5: memref<1x4x4x128xbf16, #tpu.memory_space<vmem>>, %arg6: memref<16x128xf32, #tpu.memory_space<vmem>>) attributes {dimension_semantics = [#tpu.dimension_semantics<parallel>, #tpu.dimension_semantics<parallel>], iteration_bounds = array<i64: 2, 1>, scalar_prefetch = 0 : i64, scratch_operands = 1 : i64, tpu.core_type = #tpu.core_type<tc>, window_params = [{transform_indices = @transform_0, window_bounds = array<i64: 1, 4, 5, 5, 128>}, {transform_indices = @transform_1, window_bounds = array<i64: 1, 9, 128, 128>}, {transform_indices = @transform_2, window_bounds = array<i64: 1, 128>}, {transform_indices = @transform_3, window_bounds = array<i64: 1, 4, 4, 128>}]} {
    %cst = arith.constant 0.000000e+00 : f32
    %0 = vector.broadcast %cst : f32 to vector<16x128xf32>
    %c0 = arith.constant 0 : index
    %c0_0 = arith.constant 0 : index
    %1 = vector.load %arg6[%c0, %c0_0] : memref<16x128xf32, #tpu.memory_space<vmem>>, vector<16x128xf32>
    tpu.vector_store %arg6[%c0, %c0_0], %0 {strides = array<i32>} : memref<16x128xf32, #tpu.memory_space<vmem>>, vector<16x128xf32>,
    %c0_1 = arith.constant 0 : index
    %c0_2 = arith.constant 0 : index
    %c0_3 = arith.constant 0 : index
    %c0_4 = arith.constant 0 : index
    %c0_5 = arith.constant 0 : index
    %2 = vector.load %arg2[%c0_1, %c0_2, %c0_3, %c0_4, %c0_5] : memref<1x4x5x5x128xbf16, #tpu.memory_space<vmem>>, vector<1x1x4x4x128xbf16>
    %3 = vector.shape_cast %2 : vector<1x1x4x4x128xbf16> to vector<4x4x128xbf16>
    %c0_6 = arith.constant 0 : index
    %c0_7 = arith.constant 0 : index
    %4 = vector.load %arg6[%c0_6, %c0_7] : memref<16x128xf32, #tpu.memory_space<vmem>>, vector<16x128xf32>
    %5 = vector.shape_cast %3 : vector<4x4x128xbf16> to vector<16x128xbf16>
    %c0_8 = arith.constant 0 : index
    %c0_9 = arith.constant 0 : index
    %c0_10 = arith.constant 0 : index
    %c0_11 = arith.constant 0 : index
    %6 = vector.load %arg3[%c0_8, %c0_9, %c0_10, %c0_11] : memref<1x9x128x128xbf16, #tpu.memory_space<vmem>>, vector<1x1x128x128xbf16>
    %7 = vector.shape_cast %6 : vector<1x1x128x128xbf16> to vector<128x128xbf16>
    %cst_12 = arith.constant dense<0.000000e+00> : vector<16x128xf32>
    %8 = tpu.matmul %5, %7, %cst_12 {dimension_numbers = #tpu.dot_dimension_numbers<[1], [0], [0], [1], [0, 0, 1, 1], [], []>} : vector<16x128xbf16>, vector<128x128xbf16>, vector<16x128xf32> -> vector<16x128xf32>
    %9 = arith.addf %4, %8 : vector<16x128xf32>
    %c0_13 = arith.constant 0 : index
    %c0_14 = arith.constant 0 : index
    %10 = vector.load %arg6[%c0_13, %c0_14] : memref<16x128xf32, #tpu.memory_space<vmem>>, vector<16x128xf32>
    tpu.vector_store %arg6[%c0_13, %c0_14], %9 {strides = array<i32>} : memref<16x128xf32, #tpu.memory_space<vmem>>, vector<16x128xf32>,
    %c0_15 = arith.constant 0 : index
    %c1 = arith.constant 1 : index
    %c0_16 = arith.constant 0 : index
    %c0_17 = arith.constant 0 : index
    %c0_18 = arith.constant 0 : index
    %11 = vector.load %arg2[%c0_15, %c1, %c0_16, %c0_17, %c0_18] : memref<1x4x5x5x128xbf16, #tpu.memory_space<vmem>>, vector<1x1x4x4x128xbf16>
    %12 = vector.shape_cast %11 : vector<1x1x4x4x128xbf16> to vector<4x4x128xbf16>
    %c0_19 = arith.constant 0 : index
    %c0_20 = arith.constant 0 : index
    %13 = vector.load %arg6[%c0_19, %c0_20] : memref<16x128xf32, #tpu.memory_space<vmem>>, vector<16x128xf32>
    %14 = vector.shape_cast %12 : vector<4x4x128xbf16> to vector<16x128xbf16>
    %c0_21 = arith.constant 0 : index
    %c1_22 = arith.constant 1 : index
    %c0_23 = arith.constant 0 : index
    %c0_24 = arith.constant 0 : index
    %15 = vector.load %arg3[%c0_21, %c1_22, %c0_23, %c0_24] : memref<1x9x128x128xbf16, #tpu.memory_space<vmem>>, vector<1x1x128x128xbf16>
    %16 = vector.shape_cast %15 : vector<1x1x128x128xbf16> to vector<128x128xbf16>
    %cst_25 = arith.constant dense<0.000000e+00> : vector<16x128xf32>
    %17 = tpu.matmul %14, %16, %cst_25 {dimension_numbers = #tpu.dot_dimension_numbers<[1], [0], [0], [1], [0, 0, 1, 1], [], []>} : vector<16x128xbf16>, vector<128x128xbf16>, vector<16x128xf32> -> vector<16x128xf32>
    %18 = arith.addf %13, %17 : vector<16x128xf32>
    %c0_26 = arith.constant 0 : index
    %c0_27 = arith.constant 0 : index
    %19 = vector.load %arg6[%c0_26, %c0_27] : memref<16x128xf32, #tpu.memory_space<vmem>>, vector<16x128xf32>
    tpu.vector_store %arg6[%c0_26, %c0_27], %18 {strides = array<i32>} : memref<16x128xf32, #tpu.memory_space<vmem>>, vector<16x128xf32>,
    %c0_28 = arith.constant 0 : index
    %c0_29 = arith.constant 0 : index
    %c0_30 = arith.constant 0 : index
    %c1_31 = arith.constant 1 : index
    %c0_32 = arith.constant 0 : index
    %20 = vector.load %arg2[%c0_28, %c0_29, %c0_30, %c1_31, %c0_32] : memref<1x4x5x5x128xbf16, #tpu.memory_space<vmem>>, vector<1x1x4x4x128xbf16>
    %21 = vector.shape_cast %20 : vector<1x1x4x4x128xbf16> to vector<4x4x128xbf16>
    %c0_33 = arith.constant 0 : index
    %c0_34 = arith.constant 0 : index
    %22 = vector.load %arg6[%c0_33, %c0_34] : memref<16x128xf32, #tpu.memory_space<vmem>>, vector<16x128xf32>
    %23 = vector.shape_cast %21 : vector<4x4x128xbf16> to vector<16x128xbf16>
    %c0_35 = arith.constant 0 : index
    %c2 = arith.constant 2 : index
    %c0_36 = arith.constant 0 : index
    %c0_37 = arith.constant 0 : index
    %24 = vector.load %arg3[%c0_35, %c2, %c0_36, %c0_37] : memref<1x9x128x128xbf16, #tpu.memory_space<vmem>>, vector<1x1x128x128xbf16>
    %25 = vector.shape_cast %24 : vector<1x1x128x128xbf16> to vector<128x128xbf16>
    %cst_38 = arith.constant dense<0.000000e+00> : vector<16x128xf32>
    %26 = tpu.matmul %23, %25, %cst_38 {dimension_numbers = #tpu.dot_dimension_numbers<[1], [0], [0], [1], [0, 0, 1, 1], [], []>} : vector<16x128xbf16>, vector<128x128xbf16>, vector<16x128xf32> -> vector<16x128xf32>
    %27 = arith.addf %22, %26 : vector<16x128xf32>
    %c0_39 = arith.constant 0 : index
    %c0_40 = arith.constant 0 : index
    %28 = vector.load %arg6[%c0_39, %c0_40] : memref<16x128xf32, #tpu.memory_space<vmem>>, vector<16x128xf32>
    tpu.vector_store %arg6[%c0_39, %c0_40], %27 {strides = array<i32>} : memref<16x128xf32, #tpu.memory_space<vmem>>, vector<16x128xf32>,
    %c0_41 = arith.constant 0 : index
    %c2_42 = arith.constant 2 : index
    %c0_43 = arith.constant 0 : index
    %c0_44 = arith.constant 0 : index
    %c0_45 = arith.constant 0 : index
    %29 = vector.load %arg2[%c0_41, %c2_42, %c0_43, %c0_44, %c0_45] : memref<1x4x5x5x128xbf16, #tpu.memory_space<vmem>>, vector<1x1x4x4x128xbf16>
    %30 = vector.shape_cast %29 : vector<1x1x4x4x128xbf16> to vector<4x4x128xbf16>
    %c0_46 = arith.constant 0 : index
    %c0_47 = arith.constant 0 : index
    %31 = vector.load %arg6[%c0_46, %c0_47] : memref<16x128xf32, #tpu.memory_space<vmem>>, vector<16x128xf32>
    %32 = vector.shape_cast %30 : vector<4x4x128xbf16> to vector<16x128xbf16>
    %c0_48 = arith.constant 0 : index
    %c3 = arith.constant 3 : index
    %c0_49 = arith.constant 0 : index
    %c0_50 = arith.constant 0 : index
    %33 = vector.load %arg3[%c0_48, %c3, %c0_49, %c0_50] : memref<1x9x128x128xbf16, #tpu.memory_space<vmem>>, vector<1x1x128x128xbf16>
    %34 = vector.shape_cast %33 : vector<1x1x128x128xbf16> to vector<128x128xbf16>
    %cst_51 = arith.constant dense<0.000000e+00> : vector<16x128xf32>
    %35 = tpu.matmul %32, %34, %cst_51 {dimension_numbers = #tpu.dot_dimension_numbers<[1], [0], [0], [1], [0, 0, 1, 1], [], []>} : vector<16x128xbf16>, vector<128x128xbf16>, vector<16x128xf32> -> vector<16x128xf32>
    %36 = arith.addf %31, %35 : vector<16x128xf32>
    %c0_52 = arith.constant 0 : index
    %c0_53 = arith.constant 0 : index
    %37 = vector.load %arg6[%c0_52, %c0_53] : memref<16x128xf32, #tpu.memory_space<vmem>>, vector<16x128xf32>
    tpu.vector_store %arg6[%c0_52, %c0_53], %36 {strides = array<i32>} : memref<16x128xf32, #tpu.memory_space<vmem>>, vector<16x128xf32>,
    %c0_54 = arith.constant 0 : index
    %c3_55 = arith.constant 3 : index
    %c0_56 = arith.constant 0 : index
    %c0_57 = arith.constant 0 : index
    %c0_58 = arith.constant 0 : index
    %38 = vector.load %arg2[%c0_54, %c3_55, %c0_56, %c0_57, %c0_58] : memref<1x4x5x5x128xbf16, #tpu.memory_space<vmem>>, vector<1x1x4x4x128xbf16>
    %39 = vector.shape_cast %38 : vector<1x1x4x4x128xbf16> to vector<4x4x128xbf16>
    %c0_59 = arith.constant 0 : index
    %c0_60 = arith.constant 0 : index
    %40 = vector.load %arg6[%c0_59, %c0_60] : memref<16x128xf32, #tpu.memory_space<vmem>>, vector<16x128xf32>
    %41 = vector.shape_cast %39 : vector<4x4x128xbf16> to vector<16x128xbf16>
    %c0_61 = arith.constant 0 : index
    %c4 = arith.constant 4 : index
    %c0_62 = arith.constant 0 : index
    %c0_63 = arith.constant 0 : index
    %42 = vector.load %arg3[%c0_61, %c4, %c0_62, %c0_63] : memref<1x9x128x128xbf16, #tpu.memory_space<vmem>>, vector<1x1x128x128xbf16>
    %43 = vector.shape_cast %42 : vector<1x1x128x128xbf16> to vector<128x128xbf16>
    %cst_64 = arith.constant dense<0.000000e+00> : vector<16x128xf32>
    %44 = tpu.matmul %41, %43, %cst_64 {dimension_numbers = #tpu.dot_dimension_numbers<[1], [0], [0], [1], [0, 0, 1, 1], [], []>} : vector<16x128xbf16>, vector<128x128xbf16>, vector<16x128xf32> -> vector<16x128xf32>
    %45 = arith.addf %40, %44 : vector<16x128xf32>
    %c0_65 = arith.constant 0 : index
    %c0_66 = arith.constant 0 : index
    %46 = vector.load %arg6[%c0_65, %c0_66] : memref<16x128xf32, #tpu.memory_space<vmem>>, vector<16x128xf32>
    tpu.vector_store %arg6[%c0_65, %c0_66], %45 {strides = array<i32>} : memref<16x128xf32, #tpu.memory_space<vmem>>, vector<16x128xf32>,
    %c0_67 = arith.constant 0 : index
    %c2_68 = arith.constant 2 : index
    %c0_69 = arith.constant 0 : index
    %c1_70 = arith.constant 1 : index
    %c0_71 = arith.constant 0 : index
    %47 = vector.load %arg2[%c0_67, %c2_68, %c0_69, %c1_70, %c0_71] : memref<1x4x5x5x128xbf16, #tpu.memory_space<vmem>>, vector<1x1x4x4x128xbf16>
    %48 = vector.shape_cast %47 : vector<1x1x4x4x128xbf16> to vector<4x4x128xbf16>
    %c0_72 = arith.constant 0 : index
    %c0_73 = arith.constant 0 : index
    %49 = vector.load %arg6[%c0_72, %c0_73] : memref<16x128xf32, #tpu.memory_space<vmem>>, vector<16x128xf32>
    %50 = vector.shape_cast %48 : vector<4x4x128xbf16> to vector<16x128xbf16>
    %c0_74 = arith.constant 0 : index
    %c5 = arith.constant 5 : index
    %c0_75 = arith.constant 0 : index
    %c0_76 = arith.constant 0 : index
    %51 = vector.load %arg3[%c0_74, %c5, %c0_75, %c0_76] : memref<1x9x128x128xbf16, #tpu.memory_space<vmem>>, vector<1x1x128x128xbf16>
    %52 = vector.shape_cast %51 : vector<1x1x128x128xbf16> to vector<128x128xbf16>
    %cst_77 = arith.constant dense<0.000000e+00> : vector<16x128xf32>
    %53 = tpu.matmul %50, %52, %cst_77 {dimension_numbers = #tpu.dot_dimension_numbers<[1], [0], [0], [1], [0, 0, 1, 1], [], []>} : vector<16x128xbf16>, vector<128x128xbf16>, vector<16x128xf32> -> vector<16x128xf32>
    %54 = arith.addf %49, %53 : vector<16x128xf32>
    %c0_78 = arith.constant 0 : index
    %c0_79 = arith.constant 0 : index
    %55 = vector.load %arg6[%c0_78, %c0_79] : memref<16x128xf32, #tpu.memory_space<vmem>>, vector<16x128xf32>
    tpu.vector_store %arg6[%c0_78, %c0_79], %54 {strides = array<i32>} : memref<16x128xf32, #tpu.memory_space<vmem>>, vector<16x128xf32>,
    %c0_80 = arith.constant 0 : index
    %c0_81 = arith.constant 0 : index
    %c1_82 = arith.constant 1 : index
    %c0_83 = arith.constant 0 : index
    %c0_84 = arith.constant 0 : index
    %56 = vector.load %arg2[%c0_80, %c0_81, %c1_82, %c0_83, %c0_84] : memref<1x4x5x5x128xbf16, #tpu.memory_space<vmem>>, vector<1x1x4x4x128xbf16>
    %57 = vector.shape_cast %56 : vector<1x1x4x4x128xbf16> to vector<4x4x128xbf16>
    %c0_85 = arith.constant 0 : index
    %c0_86 = arith.constant 0 : index
    %58 = vector.load %arg6[%c0_85, %c0_86] : memref<16x128xf32, #tpu.memory_space<vmem>>, vector<16x128xf32>
    %59 = vector.shape_cast %57 : vector<4x4x128xbf16> to vector<16x128xbf16>
    %c0_87 = arith.constant 0 : index
    %c6 = arith.constant 6 : index
    %c0_88 = arith.constant 0 : index
    %c0_89 = arith.constant 0 : index
    %60 = vector.load %arg3[%c0_87, %c6, %c0_88, %c0_89] : memref<1x9x128x128xbf16, #tpu.memory_space<vmem>>, vector<1x1x128x128xbf16>
    %61 = vector.shape_cast %60 : vector<1x1x128x128xbf16> to vector<128x128xbf16>
    %cst_90 = arith.constant dense<0.000000e+00> : vector<16x128xf32>
    %62 = tpu.matmul %59, %61, %cst_90 {dimension_numbers = #tpu.dot_dimension_numbers<[1], [0], [0], [1], [0, 0, 1, 1], [], []>} : vector<16x128xbf16>, vector<128x128xbf16>, vector<16x128xf32> -> vector<16x128xf32>
    %63 = arith.addf %58, %62 : vector<16x128xf32>
    %c0_91 = arith.constant 0 : index
    %c0_92 = arith.constant 0 : index
    %64 = vector.load %arg6[%c0_91, %c0_92] : memref<16x128xf32, #tpu.memory_space<vmem>>, vector<16x128xf32>
    tpu.vector_store %arg6[%c0_91, %c0_92], %63 {strides = array<i32>} : memref<16x128xf32, #tpu.memory_space<vmem>>, vector<16x128xf32>,
    %c0_93 = arith.constant 0 : index
    %c1_94 = arith.constant 1 : index
    %c1_95 = arith.constant 1 : index
    %c0_96 = arith.constant 0 : index
    %c0_97 = arith.constant 0 : index
    %65 = vector.load %arg2[%c0_93, %c1_94, %c1_95, %c0_96, %c0_97] : memref<1x4x5x5x128xbf16, #tpu.memory_space<vmem>>, vector<1x1x4x4x128xbf16>
    %66 = vector.shape_cast %65 : vector<1x1x4x4x128xbf16> to vector<4x4x128xbf16>
    %c0_98 = arith.constant 0 : index
    %c0_99 = arith.constant 0 : index
    %67 = vector.load %arg6[%c0_98, %c0_99] : memref<16x128xf32, #tpu.memory_space<vmem>>, vector<16x128xf32>
    %68 = vector.shape_cast %66 : vector<4x4x128xbf16> to vector<16x128xbf16>
    %c0_100 = arith.constant 0 : index
    %c7 = arith.constant 7 : index
    %c0_101 = arith.constant 0 : index
    %c0_102 = arith.constant 0 : index
    %69 = vector.load %arg3[%c0_100, %c7, %c0_101, %c0_102] : memref<1x9x128x128xbf16, #tpu.memory_space<vmem>>, vector<1x1x128x128xbf16>
    %70 = vector.shape_cast %69 : vector<1x1x128x128xbf16> to vector<128x128xbf16>
    %cst_103 = arith.constant dense<0.000000e+00> : vector<16x128xf32>
    %71 = tpu.matmul %68, %70, %cst_103 {dimension_numbers = #tpu.dot_dimension_numbers<[1], [0], [0], [1], [0, 0, 1, 1], [], []>} : vector<16x128xbf16>, vector<128x128xbf16>, vector<16x128xf32> -> vector<16x128xf32>
    %72 = arith.addf %67, %71 : vector<16x128xf32>
    %c0_104 = arith.constant 0 : index
    %c0_105 = arith.constant 0 : index
    %73 = vector.load %arg6[%c0_104, %c0_105] : memref<16x128xf32, #tpu.memory_space<vmem>>, vector<16x128xf32>
    tpu.vector_store %arg6[%c0_104, %c0_105], %72 {strides = array<i32>} : memref<16x128xf32, #tpu.memory_space<vmem>>, vector<16x128xf32>,
    %c0_106 = arith.constant 0 : index
    %c0_107 = arith.constant 0 : index
    %c1_108 = arith.constant 1 : index
    %c1_109 = arith.constant 1 : index
    %c0_110 = arith.constant 0 : index
    %74 = vector.load %arg2[%c0_106, %c0_107, %c1_108, %c1_109, %c0_110] : memref<1x4x5x5x128xbf16, #tpu.memory_space<vmem>>, vector<1x1x4x4x128xbf16>
    %75 = vector.shape_cast %74 : vector<1x1x4x4x128xbf16> to vector<4x4x128xbf16>
    %c0_111 = arith.constant 0 : index
    %c0_112 = arith.constant 0 : index
    %76 = vector.load %arg6[%c0_111, %c0_112] : memref<16x128xf32, #tpu.memory_space<vmem>>, vector<16x128xf32>
    %77 = vector.shape_cast %75 : vector<4x4x128xbf16> to vector<16x128xbf16>
    %c0_113 = arith.constant 0 : index
    %c8 = arith.constant 8 : index
    %c0_114 = arith.constant 0 : index
    %c0_115 = arith.constant 0 : index
    %78 = vector.load %arg3[%c0_113, %c8, %c0_114, %c0_115] : memref<1x9x128x128xbf16, #tpu.memory_space<vmem>>, vector<1x1x128x128xbf16>
    %79 = vector.shape_cast %78 : vector<1x1x128x128xbf16> to vector<128x128xbf16>
    %cst_116 = arith.constant dense<0.000000e+00> : vector<16x128xf32>
    %80 = tpu.matmul %77, %79, %cst_116 {dimension_numbers = #tpu.dot_dimension_numbers<[1], [0], [0], [1], [0, 0, 1, 1], [], []>} : vector<16x128xbf16>, vector<128x128xbf16>, vector<16x128xf32> -> vector<16x128xf32>
    %81 = arith.addf %76, %80 : vector<16x128xf32>
    %c0_117 = arith.constant 0 : index
    %c0_118 = arith.constant 0 : index
    %82 = vector.load %arg6[%c0_117, %c0_118] : memref<16x128xf32, #tpu.memory_space<vmem>>, vector<16x128xf32>
    tpu.vector_store %arg6[%c0_117, %c0_118], %81 {strides = array<i32>} : memref<16x128xf32, #tpu.memory_space<vmem>>, vector<16x128xf32>,
    %c0_119 = arith.constant 0 : index
    %c0_120 = arith.constant 0 : index
    %83 = vector.load %arg6[%c0_119, %c0_120] : memref<16x128xf32, #tpu.memory_space<vmem>>, vector<16x128xf32>
    %c0_121 = arith.constant 0 : index
    %c0_122 = arith.constant 0 : index
    %84 = vector.load %arg4[%c0_121, %c0_122] : memref<1x128xf32, #tpu.memory_space<vmem>>, vector<1x128xf32>
    %85 = vector.broadcast %84 : vector<1x128xf32> to vector<16x128xf32>
    %86 = arith.addf %83, %85 : vector<16x128xf32>
    %cst_123 = arith.constant 0.000000e+00 : f32
    %87 = vector.broadcast %cst_123 : f32 to vector<16x128xf32>
    %88 = arith.maximumf %86, %87 : vector<16x128xf32>
    %89 = vector.shape_cast %88 : vector<16x128xf32> to vector<1x4x4x128xf32>
    %90 = arith.truncf %89 : vector<1x4x4x128xf32> to vector<1x4x4x128xbf16>
    %c0_124 = arith.constant 0 : index
    %c0_125 = arith.constant 0 : index
    %c0_126 = arith.constant 0 : index
    %c0_127 = arith.constant 0 : index
    %91 = vector.load %arg5[%c0_124, %c0_125, %c0_126, %c0_127] : memref<1x4x4x128xbf16, #tpu.memory_space<vmem>>, vector<1x4x4x128xbf16>
    tpu.vector_store %arg5[%c0_124, %c0_125, %c0_126, %c0_127], %90 {strides = array<i32>} : memref<1x4x4x128xbf16, #tpu.memory_space<vmem>>, vector<1x4x4x128xbf16>,
    return
  }
  func.func @transform_0(%arg0: i32, %arg1: i32) -> (i32, i32, i32, i32, i32) {
    %c0_i32 = arith.constant 0 : i32
    %c0_i32_0 = arith.constant 0 : i32
    %c0_i32_1 = arith.constant 0 : i32
    %c0_i32_2 = arith.constant 0 : i32
    return %arg0, %c0_i32, %c0_i32_0, %c0_i32_1, %arg1 : i32, i32, i32, i32, i32
  }
  func.func @transform_1(%arg0: i32, %arg1: i32) -> (i32, i32, i32, i32) {
    %c0_i32 = arith.constant 0 : i32
    %c0_i32_0 = arith.constant 0 : i32
    %c0_i32_1 = arith.constant 0 : i32
    %c0_i32_2 = arith.constant 0 : i32
    return %arg1, %c0_i32, %c0_i32_0, %c0_i32_1 : i32, i32, i32, i32
  }
  func.func @transform_2(%arg0: i32, %arg1: i32) -> (i32, i32) {
    %c0_i32 = arith.constant 0 : i32
    %c0_i32_0 = arith.constant 0 : i32
    return %c0_i32, %arg1 : i32, i32
  }
  func.func @transform_3(%arg0: i32, %arg1: i32) -> (i32, i32, i32, i32) {
    %c0_i32 = arith.constant 0 : i32
    %c0_i32_0 = arith.constant 0 : i32
    %c0_i32_1 = arith.constant 0 : i32
    return %arg0, %c0_i32, %c0_i32_0, %arg1 : i32, i32, i32, i32
  }
}

module attributes {stable_mosaic.version = 11 : i64} {
  func.func @_dual_mm_bias_relu_kernel(%arg0: i32, %arg1: i32, %arg2: memref<16x128xbf16, #tpu.memory_space<vmem>>, %arg3: memref<128x128xbf16, #tpu.memory_space<vmem>>, %arg4: memref<1x128xf32, #tpu.memory_space<vmem>>, %arg5: memref<16x128xbf16, #tpu.memory_space<vmem>>, %arg6: memref<128x128xbf16, #tpu.memory_space<vmem>>, %arg7: memref<1x128xf32, #tpu.memory_space<vmem>>, %arg8: memref<16x128xbf16, #tpu.memory_space<vmem>>) attributes {dimension_semantics = [#tpu.dimension_semantics<parallel>, #tpu.dimension_semantics<parallel>], iteration_bounds = array<i64: 2, 1>, scalar_prefetch = 0 : i64, scratch_operands = 0 : i64, tpu.core_type = #tpu.core_type<tc>, window_params = [{transform_indices = @transform_0, window_bounds = array<i64: 16, 128>}, {transform_indices = @transform_1, window_bounds = array<i64: 128, 128>}, {transform_indices = @transform_2, window_bounds = array<i64: 1, 128>}, {transform_indices = @transform_3, window_bounds = array<i64: 16, 128>}, {transform_indices = @transform_4, window_bounds = array<i64: 128, 128>}, {transform_indices = @transform_5, window_bounds = array<i64: 1, 128>}, {transform_indices = @transform_6, window_bounds = array<i64: 16, 128>}]} {
    %c0 = arith.constant 0 : index
    %c0_0 = arith.constant 0 : index
    %0 = vector.load %arg2[%c0, %c0_0] : memref<16x128xbf16, #tpu.memory_space<vmem>>, vector<16x128xbf16>
    %c0_1 = arith.constant 0 : index
    %c0_2 = arith.constant 0 : index
    %1 = vector.load %arg3[%c0_1, %c0_2] : memref<128x128xbf16, #tpu.memory_space<vmem>>, vector<128x128xbf16>
    %cst = arith.constant dense<0.000000e+00> : vector<16x128xf32>
    %2 = tpu.matmul %0, %1, %cst {dimension_numbers = #tpu.dot_dimension_numbers<[1], [0], [0], [1], [0, 0, 1, 1], [], []>} : vector<16x128xbf16>, vector<128x128xbf16>, vector<16x128xf32> -> vector<16x128xf32>
    %c0_3 = arith.constant 0 : index
    %c0_4 = arith.constant 0 : index
    %3 = vector.load %arg5[%c0_3, %c0_4] : memref<16x128xbf16, #tpu.memory_space<vmem>>, vector<16x128xbf16>
    %c0_5 = arith.constant 0 : index
    %c0_6 = arith.constant 0 : index
    %4 = vector.load %arg6[%c0_5, %c0_6] : memref<128x128xbf16, #tpu.memory_space<vmem>>, vector<128x128xbf16>
    %cst_7 = arith.constant dense<0.000000e+00> : vector<16x128xf32>
    %5 = tpu.matmul %3, %4, %cst_7 {dimension_numbers = #tpu.dot_dimension_numbers<[1], [0], [0], [1], [0, 0, 1, 1], [], []>} : vector<16x128xbf16>, vector<128x128xbf16>, vector<16x128xf32> -> vector<16x128xf32>
    %c0_8 = arith.constant 0 : index
    %c0_9 = arith.constant 0 : index
    %6 = vector.load %arg4[%c0_8, %c0_9] : memref<1x128xf32, #tpu.memory_space<vmem>>, vector<1x128xf32>
    %7 = vector.broadcast %6 : vector<1x128xf32> to vector<16x128xf32>
    %8 = arith.addf %2, %7 : vector<16x128xf32>
    %cst_10 = arith.constant 0.000000e+00 : f32
    %9 = vector.broadcast %cst_10 : f32 to vector<16x128xf32>
    %10 = arith.maximumf %8, %9 : vector<16x128xf32>
    %c0_11 = arith.constant 0 : index
    %c0_12 = arith.constant 0 : index
    %11 = vector.load %arg7[%c0_11, %c0_12] : memref<1x128xf32, #tpu.memory_space<vmem>>, vector<1x128xf32>
    %12 = vector.broadcast %11 : vector<1x128xf32> to vector<16x128xf32>
    %13 = arith.addf %5, %12 : vector<16x128xf32>
    %cst_13 = arith.constant 0.000000e+00 : f32
    %14 = vector.broadcast %cst_13 : f32 to vector<16x128xf32>
    %15 = arith.maximumf %13, %14 : vector<16x128xf32>
    %16 = arith.addf %10, %15 : vector<16x128xf32>
    %17 = arith.truncf %16 : vector<16x128xf32> to vector<16x128xbf16>
    %c0_14 = arith.constant 0 : index
    %c0_15 = arith.constant 0 : index
    %18 = vector.load %arg8[%c0_14, %c0_15] : memref<16x128xbf16, #tpu.memory_space<vmem>>, vector<16x128xbf16>
    tpu.vector_store %arg8[%c0_14, %c0_15], %17 {strides = array<i32>} : memref<16x128xbf16, #tpu.memory_space<vmem>>, vector<16x128xbf16>,
    return
  }
  func.func @transform_0(%arg0: i32, %arg1: i32) -> (i32, i32) {
    %c0_i32 = arith.constant 0 : i32
    %c0_i32_0 = arith.constant 0 : i32
    return %arg0, %c0_i32 : i32, i32
  }
  func.func @transform_1(%arg0: i32, %arg1: i32) -> (i32, i32) {
    %c0_i32 = arith.constant 0 : i32
    %c0_i32_0 = arith.constant 0 : i32
    return %c0_i32, %arg1 : i32, i32
  }
  func.func @transform_2(%arg0: i32, %arg1: i32) -> (i32, i32) {
    %c0_i32 = arith.constant 0 : i32
    %c0_i32_0 = arith.constant 0 : i32
    return %c0_i32, %arg1 : i32, i32
  }
  func.func @transform_3(%arg0: i32, %arg1: i32) -> (i32, i32) {
    %c0_i32 = arith.constant 0 : i32
    %c0_i32_0 = arith.constant 0 : i32
    return %arg0, %c0_i32 : i32, i32
  }
  func.func @transform_4(%arg0: i32, %arg1: i32) -> (i32, i32) {
    %c0_i32 = arith.constant 0 : i32
    %c0_i32_0 = arith.constant 0 : i32
    return %c0_i32, %arg1 : i32, i32
  }
  func.func @transform_5(%arg0: i32, %arg1: i32) -> (i32, i32) {
    %c0_i32 = arith.constant 0 : i32
    %c0_i32_0 = arith.constant 0 : i32
    return %c0_i32, %arg1 : i32, i32
  }
  func.func @transform_6(%arg0: i32, %arg1: i32) -> (i32, i32) {
    %c0_i32 = arith.constant 0 : i32
    return %arg0, %arg1 : i32, i32
  }
}

</mosaic_0001>

<llo_original>
// kernel: _forward_impl.3
$region0: #{_forward_impl.3}
  #allocation0 [shape = 'u32[]', space=smem, size = 0x4, offset = 0x4, fixed_abs, tag = 'smem constant byte address 0x4 - core index']
  #allocation1 [shape = 'u32[72,128]{1,0:T(1,128)}', space=vmem, size = 0x9000, scoped, tag = 'internal scratch']
  %s0 = inlined_call_operand.vmem [shape: bf16[128,128], index: 0, kind: input, shape index: {}]
  %s1 = inlined_call_operand.vmem [shape: bf16[128,128], index: 1, kind: input, shape index: {}]
  %s2 = inlined_call_operand.vmem [shape: f32[1,128], index: 2, kind: input, shape index: {}]
  %s3 = inlined_call_operand.vmem [shape: bf16[128,128], index: 3, kind: output, shape index: {}]
  %s4 = sld [smem:[#allocation0]]
  $region45: #{_forward_impl.3} parent=0
    _
  %s6 = ssub.s32 1, %s4
  %s7 = scalar_select 0, %s6, %s4
  loop: start=0, step=1, limit=4
  $region2: #{_forward_impl.3} parent=0 // loop_pre_header
    _
  $region3: #{_forward_impl.3} parent=0 // loop_header
    %s9 = sphi 0, %s13
    %p10 = scmp.ge.s32.totalorder %s9, 4
    %s16 = sphi 0, %s28
    %s17 = sphi 0, %s24
    %s18 = sphi 0, %s16
    %s19 = sphi 0, %s17
    %s20 = sphi 0, %s18
    %s21 = sphi 0, %s19
    %s31 = sphi 0, %s33
    %s34 = sphi 0, %s31
    %s35 = sphi 0, %s34
    %s51 = sphi 0, %s35
    %s57 = sphi 0, %s59
    %s60 = sphi 0, %s57
    %s61 = sphi 0, %s60
    %s77 = sphi 0, %s61
    %s83 = sphi 0, %s85
    %s86 = sphi 0, %s83
    %s87 = sphi 0, %s86
    %s103 = sphi 0, %s87
    %s111 = sphi 0, %s113
    %s114 = sphi 0, %s111
    %s115 = sphi 0, %s114
    %s131 = sphi 0, %s115
  $region4: #{_forward_impl.3} parent=0 // loop_header_branch
    %12 = sbr.rel (%p10) target = $region8
  $region5: #{_forward_impl.3} parent=0 // loop_body
    %s14 = ssub.s32 %s9, 1
    %s15 = ssub.s32 %s9, 2
    %s22 = sadd.s32 1, %s17
    %p23 = scmp.ge.s32.totalorder %s22, 1
    %s24 = scalar_select %p23, 0, %s22
    %s25 = sadd.s32 1, %s16
    %s26 = scalar_select %p23, %s25, %s16
    %p27 = scmp.ge.s32.totalorder %s26, 2
    %s28 = scalar_select %p27, 0, %s26
    %s29 = ssub.s32 %s16, %s28
    %p30 = scmp.eq.s32.totalorder %s29, 0
    %s32 = sadd.s32 %s31, 1
    %s33 = scalar_select %p30, %s31, %s32
    %p36 = pneg %p30
    %p37 = scmp.eq.s32.totalorder %s9, 1
    %p38 = por %p36, %p37
    %p39 = scmp.ne.s32.totalorder %s31, %s34
    %p40 = scmp.eq.s32.totalorder %s9, 0
    %p41 = por %p39, %p40
    %p42 = scmp.ne.s32.totalorder %s31, %s34
    %p43 = scmp.eq.s32.totalorder %s14, 1
    %p44 = por %p42, %p43
    %p45 = scmp.ne.s32.totalorder %s34, %s35
    %p46 = scmp.eq.s32.totalorder %s14, 0
    %p47 = por %p45, %p46
    %p48 = scmp.ne.s32.totalorder %s34, %s35
    %p49 = scmp.eq.s32.totalorder %s15, 1
    %p50 = por %p48, %p49
    %p52 = scmp.ne.s32.totalorder %s35, %s51
    %p53 = scmp.eq.s32.totalorder %s15, 0
    %p54 = por %p52, %p53
    %s55 = ssub.s32 %s17, %s24
    %p56 = scmp.eq.s32.totalorder %s55, 0
    %s58 = sadd.s32 %s57, 1
    %s59 = scalar_select %p56, %s57, %s58
    %p62 = pneg %p56
    %p63 = scmp.eq.s32.totalorder %s9, 1
    %p64 = por %p62, %p63
    %p65 = scmp.ne.s32.totalorder %s57, %s60
    %p66 = scmp.eq.s32.totalorder %s9, 0
    %p67 = por %p65, %p66
    %p68 = scmp.ne.s32.totalorder %s57, %s60
    %p69 = scmp.eq.s32.totalorder %s14, 1
    %p70 = por %p68, %p69
    %p71 = scmp.ne.s32.totalorder %s60, %s61
    %p72 = scmp.eq.s32.totalorder %s14, 0
    %p73 = por %p71, %p72
    %p74 = scmp.ne.s32.totalorder %s60, %s61
    %p75 = scmp.eq.s32.totalorder %s15, 1
    %p76 = por %p74, %p75
    %p78 = scmp.ne.s32.totalorder %s61, %s77
    %p79 = scmp.eq.s32.totalorder %s15, 0
    %p80 = por %p78, %p79
    %s81 = ssub.s32 %s17, %s24
    %p82 = scmp.eq.s32.totalorder %s81, 0
    %s84 = sadd.s32 %s83, 1
    %s85 = scalar_select %p82, %s83, %s84
    %p88 = pneg %p82
    %p89 = scmp.eq.s32.totalorder %s9, 1
    %p90 = por %p88, %p89
    %p91 = scmp.ne.s32.totalorder %s83, %s86
    %p92 = scmp.eq.s32.totalorder %s9, 0
    %p93 = por %p91, %p92
    %p94 = scmp.ne.s32.totalorder %s83, %s86
    %p95 = scmp.eq.s32.totalorder %s14, 1
    %p96 = por %p94, %p95
    %p97 = scmp.ne.s32.totalorder %s86, %s87
    %p98 = scmp.eq.s32.totalorder %s14, 0
    %p99 = por %p97, %p98
    %p100 = scmp.ne.s32.totalorder %s86, %s87
    %p101 = scmp.eq.s32.totalorder %s15, 1
    %p102 = por %p100, %p101
    %p104 = scmp.ne.s32.totalorder %s87, %s103
    %p105 = scmp.eq.s32.totalorder %s15, 0
    %p106 = por %p104, %p105
    %s107 = ssub.s32 %s16, %s28
    %s108 = ssub.s32 %s17, %s24
    %s109 = sor.u32 %s107, %s108
    %p110 = scmp.eq.s32.totalorder %s109, 0
    %s112 = sadd.s32 %s111, 1
    %s113 = scalar_select %p110, %s111, %s112
    %p116 = pneg %p110
    %p117 = scmp.eq.s32.totalorder %s9, 1
    %p118 = por %p116, %p117
    %p119 = scmp.ne.s32.totalorder %s111, %s114
    %p120 = scmp.eq.s32.totalorder %s9, 0
    %p121 = por %p119, %p120
    %p122 = scmp.ne.s32.totalorder %s111, %s114
    %p123 = scmp.eq.s32.totalorder %s14, 1
    %p124 = por %p122, %p123
    %p125 = scmp.ne.s32.totalorder %s114, %s115
    %p126 = scmp.eq.s32.totalorder %s14, 0
    %p127 = por %p125, %p126
    %p128 = scmp.ne.s32.totalorder %s114, %s115
    %p129 = scmp.eq.s32.totalorder %s15, 1
    %p130 = por %p128, %p129
    %p132 = scmp.ne.s32.totalorder %s115, %s131
    %p133 = scmp.eq.s32.totalorder %s15, 0
    %p134 = por %p132, %p133
    %p135 = scmp.le.s32.totalorder 1, %s9
    %p136 = scmp.lt.s32.totalorder %s9, 3
    %p137 = pnand %p135, %p136
    %p138 = pneg %p137
    // Predicated region
    $region9: #{_forward_impl.3} parent=5 // pred_check
      _
    $region10: #{_forward_impl.3} parent=5 // pred_check_branch
      %140 = sbr.rel (%p137) target = $region12
    $region11: #{_forward_impl.3} parent=5 // pred_region
      %s141 = ssub.s32 %s9, 1
      // Predicated region
      $region13: #{_forward_impl.3} parent=11 // pred_check
        %p142 = pneg %p73
      $region14: #{_forward_impl.3} parent=11 // pred_check_branch
        %144 = sbr.rel (%p142) target = $region16
      $region15: #{_forward_impl.3} parent=11 // pred_region
        %p145 = scmp.lt.s32.totalorder %s19, 0
        %s146 = scalar_select %p145, %s19, 0
        %s147 = smul.addr %s146, 4
        %s148 = scalar_lea.vmem %s1, %s147
      $region16: #{_forward_impl.3} parent=11 // pred_fallthru
        _
      // Predicated region
      $region17: #{_forward_impl.3} parent=11 // pred_check
        %p149 = pneg %p99
      $region18: #{_forward_impl.3} parent=11 // pred_check_branch
        %151 = sbr.rel (%p149) target = $region20
      $region19: #{_forward_impl.3} parent=11 // pred_region
        %p152 = scmp.lt.s32.totalorder %s19, 0
        %s153 = scalar_select %p152, %s19, 0
        %s154 = scalar_lea.vmem %s2, %s153
      $region20: #{_forward_impl.3} parent=11 // pred_fallthru
        _
    $region12: #{_forward_impl.3} parent=5 // pred_fallthru
      _
    %p155 = scmp.lt.s32.totalorder %s9, 2
    // Predicated region
    $region21: #{_forward_impl.3} parent=5 // pred_check
      %p156 = pneg %p155
    $region22: #{_forward_impl.3} parent=5 // pred_check_branch
      %158 = sbr.rel (%p156) target = $region24
    $region23: #{_forward_impl.3} parent=5 // pred_region
      // Predicated region
      $region25: #{_forward_impl.3} parent=23 // pred_check
        %p159 = pneg %p41
      $region26: #{_forward_impl.3} parent=23 // pred_check_branch
        %161 = sbr.rel (%p159) target = $region28
      $region27: #{_forward_impl.3} parent=23 // pred_region
        %s162 = smul.u32 8, %s16
        %p163 = scmp.lt.s32.totalorder %s162, 15
        %s164 = scalar_select %p163, %s162, 15
        %s165 = smul.addr %s164, 4
        %s166 = scalar_lea.vmem %s0, %s165
        %s167 = smul.u32 8, %s16
      $region28: #{_forward_impl.3} parent=23 // pred_fallthru
        _
    $region24: #{_forward_impl.3} parent=5 // pred_fallthru
      _
    %p168 = scmp.le.s32.totalorder 1, %s9
    %p169 = scmp.lt.s32.totalorder %s9, 3
    %p170 = pnand %p168, %p169
    %p171 = pneg %p170
    // Predicated region
    $region29: #{_forward_impl.3} parent=5 // pred_check
      _
    $region30: #{_forward_impl.3} parent=5 // pred_check_branch
      %173 = sbr.rel (%p170) target = $region32
    $region31: #{_forward_impl.3} parent=5 // pred_region
      %s174 = ssub.s32 %s9, 1
      %s175 = smul.u32 8, %s18
      %p176 = scmp.lt.s32.totalorder %s175, 15
      %s177 = scalar_select %p176, %s175, 15
      %s178 = smul.addr %s177, 4
      %s179 = scalar_lea.vmem %s0, %s178
      %p180 = pneg %p47
      %p181 = pneg %p44
      %p182 = scmp.lt.s32.totalorder %s19, 0
      %s183 = scalar_select %p182, %s19, 0
      %s184 = smul.addr %s183, 4
      %s185 = scalar_lea.vmem %s1, %s184
      %p186 = pneg %p73
      %p187 = pneg %p70
      %p188 = scmp.lt.s32.totalorder %s19, 0
      %s189 = scalar_select %p188, %s19, 0
      %s190 = scalar_lea.vmem %s2, %s189
      %p191 = pneg %p99
      %p192 = pneg %p96
      %p193 = pneg %p127
      %p194 = pneg %p124
      %s195 = smul.u32 8, %s18
      %p196 = scmp.lt.s32.totalorder %s195, 15
      %s197 = scalar_select %p196, %s195, 15
      %p198 = scmp.lt.s32.totalorder %s19, 0
      %s199 = scalar_select %p198, %s19, 0
      %s200 = sadd.s32 %s199, %s197
      %s201 = smul.addr %s200, 4
      %s202 = scalar_lea.vmem %s3, %s201
      %s203 = smul.u32 8, %s18
      %p204 = scmp.lt.s32.totalorder %s203, 15
      %s205 = scalar_select %p204, %s203, 15
      %s206 = smul.addr %s205, 4
      %s207 = scalar_lea.vmem %s0, %s206
      %s208 = smul.u32 8, %s18
      %p209 = scmp.lt.s32.totalorder %s19, 0
      %s210 = scalar_select %p209, %s19, 0
      %s211 = smul.addr %s210, 4
      %s212 = scalar_lea.vmem %s1, %s211
      %p213 = scmp.lt.s32.totalorder %s19, 0
      %s214 = scalar_select %p213, %s19, 0
      %s215 = scalar_lea.vmem %s2, %s214
      %s216 = smul.u32 8, %s18
      %p217 = scmp.lt.s32.totalorder %s216, 15
      %s218 = scalar_select %p217, %s216, 15
      %p219 = scmp.lt.s32.totalorder %s19, 0
      %s220 = scalar_select %p219, %s19, 0
      %s221 = sadd.s32 %s220, %s218
      %s222 = smul.addr %s221, 4
      %s223 = scalar_lea.vmem %s3, %s222
      %s224 = smul.u32 8, %s18
      %v225 = vld [vmem:[%s207] sm:$0xf]
      %v226 = vld [vmem:[%s207 + $0x4] sm:$0xf]
      %v227 = vld [vmem:[%s207 + $0x8] sm:$0xf]
      %v228 = vld [vmem:[%s207 + $0xc] sm:$0xf]
      %v229 = vld [vmem:[%s207 + $0x10] sm:$0xf]
      %v230 = vld [vmem:[%s207 + $0x14] sm:$0xf]
      %v231 = vld [vmem:[%s207 + $0x18] sm:$0xf]
      %v232 = vld [vmem:[%s207 + $0x1c] sm:$0xf]
      %v233 = vld [vmem:[%s212] sm:$0xf]
      %v234 = vld [vmem:[%s212 + $0x4] sm:$0xf]
      %v235 = vld [vmem:[%s212 + $0x8] sm:$0xf]
      %v236 = vld [vmem:[%s212 + $0xc] sm:$0xf]
      %v237 = vld [vmem:[%s212 + $0x10] sm:$0xf]
      %v238 = vld [vmem:[%s212 + $0x14] sm:$0xf]
      %v239 = vld [vmem:[%s212 + $0x18] sm:$0xf]
      %v240 = vld [vmem:[%s212 + $0x1c] sm:$0xf]
      %v241 = vld [vmem:[%s212 + $0x20] sm:$0xf]
      %v242 = vld [vmem:[%s212 + $0x24] sm:$0xf]
      %v243 = vld [vmem:[%s212 + $0x28] sm:$0xf]
      %v244 = vld [vmem:[%s212 + $0x2c] sm:$0xf]
      %v245 = vld [vmem:[%s212 + $0x30] sm:$0xf]
      %v246 = vld [vmem:[%s212 + $0x34] sm:$0xf]
      %v247 = vld [vmem:[%s212 + $0x38] sm:$0xf]
      %v248 = vld [vmem:[%s212 + $0x3c] sm:$0xf]
      %v249 = vld [vmem:[%s215] sm:$0x1]
      %v251 = vperm.slane %v249, 0
      %v261 = vunpack.c.l.b16 %v225
      %v262 = vunpack.c.l.b16 %v226
      %v263 = vunpack.c.l.b16 %v227
      %v264 = vunpack.c.l.b16 %v228
      %v265 = vunpack.c.l.b16 %v229
      %v266 = vunpack.c.l.b16 %v230
      %v267 = vunpack.c.l.b16 %v231
      %v268 = vunpack.c.l.b16 %v232
      %v269 = vpack.c.b16 %v262, %v261
      %v270 = vpack.c.b16 %v264, %v263
      %v271 = vpack.c.b16 %v266, %v265
      %v272 = vpack.c.b16 %v268, %v267
      %v293 = vunpack.c.l.b16 %v233
      %v294 = vunpack.c.l.b16 %v234
      %v295 = vunpack.c.l.b16 %v235
      %v296 = vunpack.c.l.b16 %v236
      %v297 = vunpack.c.l.b16 %v237
      %v298 = vunpack.c.l.b16 %v238
      %v299 = vunpack.c.l.b16 %v239
      %v300 = vunpack.c.l.b16 %v240
      %v301 = vunpack.c.l.b16 %v241
      %v302 = vunpack.c.l.b16 %v242
      %v303 = vunpack.c.l.b16 %v243
      %v304 = vunpack.c.l.b16 %v244
      %v305 = vunpack.c.l.b16 %v245
      %v306 = vunpack.c.l.b16 %v246
      %v307 = vunpack.c.l.b16 %v247
      %v308 = vunpack.c.l.b16 %v248
      %v309 = vpack.c.b16 %v294, %v293
      %v310 = vpack.c.b16 %v296, %v295
      %v311 = vpack.c.b16 %v298, %v297
      %v312 = vpack.c.b16 %v300, %v299
      %v313 = vpack.c.b16 %v302, %v301
      %v314 = vpack.c.b16 %v304, %v303
      %v315 = vpack.c.b16 %v306, %v305
      %v316 = vpack.c.b16 %v308, %v307
      %325 = vmatpush.bf16.msra.mxu0 %v316
      %326 = vmatpush.bf16.msra.mxu0 %v315
      %327 = vmatpush.bf16.msra.mxu0 %v314
      %328 = vmatpush.bf16.msra.mxu0 %v313
      %329 = vmatpush.bf16.msra.mxu0 %v312
      %330 = vmatpush.bf16.msra.mxu0 %v311
      %331 = vmatpush.bf16.msra.mxu0 %v310
      %332 = vmatpush.bf16.msra.mxu0 %v309
      %333 = vmatmul.bf16.gmra.mxu0 %v269
      %v334 = vpop.f32.mrf.mxu0
      %v335 = vadd.f32 %v251, %v334
      %v336 = vpop.f32.mrf.mxu0
      %v337 = vadd.f32 %v251, %v336
      %338 = vmatmul.bf16.gmra.mxu0 %v270
      %v339 = vpop.f32.mrf.mxu0
      %v340 = vadd.f32 %v251, %v339
      %v341 = vpop.f32.mrf.mxu0
      %v342 = vadd.f32 %v251, %v341
      %343 = vmatmul.bf16.gmra.mxu0 %v271
      %v344 = vpop.f32.mrf.mxu0
      %v345 = vadd.f32 %v251, %v344
      %v346 = vpop.f32.mrf.mxu0
      %v347 = vadd.f32 %v251, %v346
      %348 = vmatmul.bf16.gmra.mxu0 %v272
      %v349 = vpop.f32.mrf.mxu0
      %v350 = vadd.f32 %v251, %v349
      %v351 = vpop.f32.mrf.mxu0
      %v352 = vadd.f32 %v251, %v351
      %353 = vdwg.mxu0
      %v354 = vmax.f32 %v335, 0.0
      %v355 = vmax.f32 %v337, 0.0
      %v356 = vmax.f32 %v340, 0.0
      %v357 = vmax.f32 %v342, 0.0
      %v358 = vmax.f32 %v345, 0.0
      %v359 = vmax.f32 %v347, 0.0
      %v360 = vmax.f32 %v350, 0.0
      %v361 = vmax.f32 %v352, 0.0
      %v362 = vpack.c.bf16 %v354, %v354
      %v363 = vpack.c.bf16 %v355, %v355
      %v364 = vpack.c.bf16 %v356, %v356
      %v365 = vpack.c.bf16 %v357, %v357
      %v366 = vpack.c.bf16 %v358, %v358
      %v367 = vpack.c.bf16 %v359, %v359
      %v368 = vpack.c.bf16 %v360, %v360
      %v369 = vpack.c.bf16 %v361, %v361
      %370 = vst [vmem:[%s223] sm:$0xf] %v362
      %371 = vst [vmem:[%s223 + $0x4] sm:$0xf] %v363
      %372 = vst [vmem:[%s223 + $0x8] sm:$0xf] %v364
      %373 = vst [vmem:[%s223 + $0xc] sm:$0xf] %v365
      %374 = vst [vmem:[%s223 + $0x10] sm:$0xf] %v366
      %375 = vst [vmem:[%s223 + $0x14] sm:$0xf] %v367
      %376 = vst [vmem:[%s223 + $0x18] sm:$0xf] %v368
      %377 = vst [vmem:[%s223 + $0x1c] sm:$0xf] %v369
      %s378 = smul.u32 8, %s18
      %p379 = scmp.lt.s32.totalorder %s378, 15
      %s380 = scalar_select %p379, %s378, 15
      %p381 = scmp.lt.s32.totalorder %s19, 0
      %s382 = scalar_select %p381, %s19, 0
      %s383 = sadd.s32 %s382, %s380
      %s384 = smul.addr %s383, 4
      %s385 = scalar_lea.vmem %s3, %s384
      // Predicated region
      $region33: #{_forward_impl.3} parent=31 // pred_check
        %p386 = pneg %p124
      $region34: #{_forward_impl.3} parent=31 // pred_check_branch
        %388 = sbr.rel (%p386) target = $region36
      $region35: #{_forward_impl.3} parent=31 // pred_region
        %s389 = smul.u32 8, %s18
      $region36: #{_forward_impl.3} parent=31 // pred_fallthru
        _
    $region32: #{_forward_impl.3} parent=5 // pred_fallthru
      _
    %p390 = scmp.le.s32.totalorder 2, %s9
    // Predicated region
    $region37: #{_forward_impl.3} parent=5 // pred_check
      %p391 = pneg %p390
    $region38: #{_forward_impl.3} parent=5 // pred_check_branch
      %393 = sbr.rel (%p391) target = $region40
    $region39: #{_forward_impl.3} parent=5 // pred_region
      %s394 = ssub.s32 %s9, 2
      // Predicated region
      $region41: #{_forward_impl.3} parent=39 // pred_check
        %p395 = pneg %p130
      $region42: #{_forward_impl.3} parent=39 // pred_check_branch
        %397 = sbr.rel (%p395) target = $region44
      $region43: #{_forward_impl.3} parent=39 // pred_region
        %s398 = smul.u32 8, %s20
        %p399 = scmp.lt.s32.totalorder %s398, 15
        %s400 = scalar_select %p399, %s398, 15
        %p401 = scmp.lt.s32.totalorder %s21, 0
        %s402 = scalar_select %p401, %s21, 0
        %s403 = sadd.s32 %s402, %s400
        %s404 = smul.addr %s403, 4
        %s405 = scalar_lea.vmem %s3, %s404
      $region44: #{_forward_impl.3} parent=39 // pred_fallthru
        _
    $region40: #{_forward_impl.3} parent=5 // pred_fallthru
      _
  $region6: #{_forward_impl.3} parent=0 // loop_footer
    %s13 = sadd.s32 1, %s9
  $region7: #{_forward_impl.3} parent=0 // loop_footer_branch
    %8 = sbr.rel target = $region3
  $region8: #{_forward_impl.3} parent=0 // loop_exit
    _

// kernel: _forward_impl.5
$region0: #{_forward_impl.5}
  #allocation0 [shape = 'u32[]', space=smem, size = 0x4, offset = 0x4, fixed_abs, tag = 'smem constant byte address 0x4 - core index']
  #allocation1 [shape = 'u32[72,128]{1,0:T(1,128)}', space=vmem, size = 0x9000, scoped, tag = 'internal scratch']
  %s0 = inlined_call_operand.vmem [shape: bf16[32,128], index: 0, kind: input, shape index: {}]
  %s1 = inlined_call_operand.vmem [shape: bf16[128,128], index: 1, kind: input, shape index: {}]
  %s2 = inlined_call_operand.vmem [shape: f32[1,128], index: 2, kind: input, shape index: {}]
  %s3 = inlined_call_operand.vmem [shape: bf16[32,128], index: 3, kind: input, shape index: {}]
  %s4 = inlined_call_operand.vmem [shape: bf16[128,128], index: 4, kind: input, shape index: {}]
  %s5 = inlined_call_operand.vmem [shape: f32[1,128], index: 5, kind: input, shape index: {}]
  %s6 = inlined_call_operand.vmem [shape: bf16[32,128], index: 6, kind: output, shape index: {}]
  %s7 = sld [smem:[#allocation0]]
  $region57: #{_forward_impl.5} parent=0
    _
  %s9 = ssub.s32 1, %s7
  %s10 = scalar_select 0, %s9, %s7
  loop: start=0, step=1, limit=4
  $region2: #{_forward_impl.5} parent=0 // loop_pre_header
    _
  $region3: #{_forward_impl.5} parent=0 // loop_header
    %s12 = sphi 0, %s16
    %p13 = scmp.ge.s32.totalorder %s12, 4
    %s19 = sphi 0, %s31
    %s20 = sphi 0, %s27
    %s21 = sphi 0, %s19
    %s22 = sphi 0, %s20
    %s23 = sphi 0, %s21
    %s24 = sphi 0, %s22
    %s34 = sphi 0, %s36
    %s37 = sphi 0, %s34
    %s38 = sphi 0, %s37
    %s54 = sphi 0, %s38
    %s60 = sphi 0, %s62
    %s63 = sphi 0, %s60
    %s64 = sphi 0, %s63
    %s80 = sphi 0, %s64
    %s86 = sphi 0, %s88
    %s89 = sphi 0, %s86
    %s90 = sphi 0, %s89
    %s106 = sphi 0, %s90
    %s112 = sphi 0, %s114
    %s115 = sphi 0, %s112
    %s116 = sphi 0, %s115
    %s132 = sphi 0, %s116
    %s138 = sphi 0, %s140
    %s141 = sphi 0, %s138
    %s142 = sphi 0, %s141
    %s158 = sphi 0, %s142
    %s164 = sphi 0, %s166
    %s167 = sphi 0, %s164
    %s168 = sphi 0, %s167
    %s184 = sphi 0, %s168
    %s192 = sphi 0, %s194
    %s195 = sphi 0, %s192
    %s196 = sphi 0, %s195
    %s212 = sphi 0, %s196
  $region4: #{_forward_impl.5} parent=0 // loop_header_branch
    %15 = sbr.rel (%p13) target = $region8
  $region5: #{_forward_impl.5} parent=0 // loop_body
    %s17 = ssub.s32 %s12, 1
    %s18 = ssub.s32 %s12, 2
    %s25 = sadd.s32 1, %s20
    %p26 = scmp.ge.s32.totalorder %s25, 1
    %s27 = scalar_select %p26, 0, %s25
    %s28 = sadd.s32 1, %s19
    %s29 = scalar_select %p26, %s28, %s19
    %p30 = scmp.ge.s32.totalorder %s29, 2
    %s31 = scalar_select %p30, 0, %s29
    %s32 = ssub.s32 %s19, %s31
    %p33 = scmp.eq.s32.totalorder %s32, 0
    %s35 = sadd.s32 %s34, 1
    %s36 = scalar_select %p33, %s34, %s35
    %p39 = pneg %p33
    %p40 = scmp.eq.s32.totalorder %s12, 1
    %p41 = por %p39, %p40
    %p42 = scmp.ne.s32.totalorder %s34, %s37
    %p43 = scmp.eq.s32.totalorder %s12, 0
    %p44 = por %p42, %p43
    %p45 = scmp.ne.s32.totalorder %s34, %s37
    %p46 = scmp.eq.s32.totalorder %s17, 1
    %p47 = por %p45, %p46
    %p48 = scmp.ne.s32.totalorder %s37, %s38
    %p49 = scmp.eq.s32.totalorder %s17, 0
    %p50 = por %p48, %p49
    %p51 = scmp.ne.s32.totalorder %s37, %s38
    %p52 = scmp.eq.s32.totalorder %s18, 1
    %p53 = por %p51, %p52
    %p55 = scmp.ne.s32.totalorder %s38, %s54
    %p56 = scmp.eq.s32.totalorder %s18, 0
    %p57 = por %p55, %p56
    %s58 = ssub.s32 %s20, %s27
    %p59 = scmp.eq.s32.totalorder %s58, 0
    %s61 = sadd.s32 %s60, 1
    %s62 = scalar_select %p59, %s60, %s61
    %p65 = pneg %p59
    %p66 = scmp.eq.s32.totalorder %s12, 1
    %p67 = por %p65, %p66
    %p68 = scmp.ne.s32.totalorder %s60, %s63
    %p69 = scmp.eq.s32.totalorder %s12, 0
    %p70 = por %p68, %p69
    %p71 = scmp.ne.s32.totalorder %s60, %s63
    %p72 = scmp.eq.s32.totalorder %s17, 1
    %p73 = por %p71, %p72
    %p74 = scmp.ne.s32.totalorder %s63, %s64
    %p75 = scmp.eq.s32.totalorder %s17, 0
    %p76 = por %p74, %p75
    %p77 = scmp.ne.s32.totalorder %s63, %s64
    %p78 = scmp.eq.s32.totalorder %s18, 1
    %p79 = por %p77, %p78
    %p81 = scmp.ne.s32.totalorder %s64, %s80
    %p82 = scmp.eq.s32.totalorder %s18, 0
    %p83 = por %p81, %p82
    %s84 = ssub.s32 %s20, %s27
    %p85 = scmp.eq.s32.totalorder %s84, 0
    %s87 = sadd.s32 %s86, 1
    %s88 = scalar_select %p85, %s86, %s87
    %p91 = pneg %p85
    %p92 = scmp.eq.s32.totalorder %s12, 1
    %p93 = por %p91, %p92
    %p94 = scmp.ne.s32.totalorder %s86, %s89
    %p95 = scmp.eq.s32.totalorder %s12, 0
    %p96 = por %p94, %p95
    %p97 = scmp.ne.s32.totalorder %s86, %s89
    %p98 = scmp.eq.s32.totalorder %s17, 1
    %p99 = por %p97, %p98
    %p100 = scmp.ne.s32.totalorder %s89, %s90
    %p101 = scmp.eq.s32.totalorder %s17, 0
    %p102 = por %p100, %p101
    %p103 = scmp.ne.s32.totalorder %s89, %s90
    %p104 = scmp.eq.s32.totalorder %s18, 1
    %p105 = por %p103, %p104
    %p107 = scmp.ne.s32.totalorder %s90, %s106
    %p108 = scmp.eq.s32.totalorder %s18, 0
    %p109 = por %p107, %p108
    %s110 = ssub.s32 %s19, %s31
    %p111 = scmp.eq.s32.totalorder %s110, 0
    %s113 = sadd.s32 %s112, 1
    %s114 = scalar_select %p111, %s112, %s113
    %p117 = pneg %p111
    %p118 = scmp.eq.s32.totalorder %s12, 1
    %p119 = por %p117, %p118
    %p120 = scmp.ne.s32.totalorder %s112, %s115
    %p121 = scmp.eq.s32.totalorder %s12, 0
    %p122 = por %p120, %p121
    %p123 = scmp.ne.s32.totalorder %s112, %s115
    %p124 = scmp.eq.s32.totalorder %s17, 1
    %p125 = por %p123, %p124
    %p126 = scmp.ne.s32.totalorder %s115, %s116
    %p127 = scmp.eq.s32.totalorder %s17, 0
    %p128 = por %p126, %p127
    %p129 = scmp.ne.s32.totalorder %s115, %s116
    %p130 = scmp.eq.s32.totalorder %s18, 1
    %p131 = por %p129, %p130
    %p133 = scmp.ne.s32.totalorder %s116, %s132
    %p134 = scmp.eq.s32.totalorder %s18, 0
    %p135 = por %p133, %p134
    %s136 = ssub.s32 %s20, %s27
    %p137 = scmp.eq.s32.totalorder %s136, 0
    %s139 = sadd.s32 %s138, 1
    %s140 = scalar_select %p137, %s138, %s139
    %p143 = pneg %p137
    %p144 = scmp.eq.s32.totalorder %s12, 1
    %p145 = por %p143, %p144
    %p146 = scmp.ne.s32.totalorder %s138, %s141
    %p147 = scmp.eq.s32.totalorder %s12, 0
    %p148 = por %p146, %p147
    %p149 = scmp.ne.s32.totalorder %s138, %s141
    %p150 = scmp.eq.s32.totalorder %s17, 1
    %p151 = por %p149, %p150
    %p152 = scmp.ne.s32.totalorder %s141, %s142
    %p153 = scmp.eq.s32.totalorder %s17, 0
    %p154 = por %p152, %p153
    %p155 = scmp.ne.s32.totalorder %s141, %s142
    %p156 = scmp.eq.s32.totalorder %s18, 1
    %p157 = por %p155, %p156
    %p159 = scmp.ne.s32.totalorder %s142, %s158
    %p160 = scmp.eq.s32.totalorder %s18, 0
    %p161 = por %p159, %p160
    %s162 = ssub.s32 %s20, %s27
    %p163 = scmp.eq.s32.totalorder %s162, 0
    %s165 = sadd.s32 %s164, 1
    %s166 = scalar_select %p163, %s164, %s165
    %p169 = pneg %p163
    %p170 = scmp.eq.s32.totalorder %s12, 1
    %p171 = por %p169, %p170
    %p172 = scmp.ne.s32.totalorder %s164, %s167
    %p173 = scmp.eq.s32.totalorder %s12, 0
    %p174 = por %p172, %p173
    %p175 = scmp.ne.s32.totalorder %s164, %s167
    %p176 = scmp.eq.s32.totalorder %s17, 1
    %p177 = por %p175, %p176
    %p178 = scmp.ne.s32.totalorder %s167, %s168
    %p179 = scmp.eq.s32.totalorder %s17, 0
    %p180 = por %p178, %p179
    %p181 = scmp.ne.s32.totalorder %s167, %s168
    %p182 = scmp.eq.s32.totalorder %s18, 1
    %p183 = por %p181, %p182
    %p185 = scmp.ne.s32.totalorder %s168, %s184
    %p186 = scmp.eq.s32.totalorder %s18, 0
    %p187 = por %p185, %p186
    %s188 = ssub.s32 %s19, %s31
    %s189 = ssub.s32 %s20, %s27
    %s190 = sor.u32 %s188, %s189
    %p191 = scmp.eq.s32.totalorder %s190, 0
    %s193 = sadd.s32 %s192, 1
    %s194 = scalar_select %p191, %s192, %s193
    %p197 = pneg %p191
    %p198 = scmp.eq.s32.totalorder %s12, 1
    %p199 = por %p197, %p198
    %p200 = scmp.ne.s32.totalorder %s192, %s195
    %p201 = scmp.eq.s32.totalorder %s12, 0
    %p202 = por %p200, %p201
    %p203 = scmp.ne.s32.totalorder %s192, %s195
    %p204 = scmp.eq.s32.totalorder %s17, 1
    %p205 = por %p203, %p204
    %p206 = scmp.ne.s32.totalorder %s195, %s196
    %p207 = scmp.eq.s32.totalorder %s17, 0
    %p208 = por %p206, %p207
    %p209 = scmp.ne.s32.totalorder %s195, %s196
    %p210 = scmp.eq.s32.totalorder %s18, 1
    %p211 = por %p209, %p210
    %p213 = scmp.ne.s32.totalorder %s196, %s212
    %p214 = scmp.eq.s32.totalorder %s18, 0
    %p215 = por %p213, %p214
    %p216 = scmp.le.s32.totalorder 1, %s12
    %p217 = scmp.lt.s32.totalorder %s12, 3
    %p218 = pnand %p216, %p217
    %p219 = pneg %p218
    // Predicated region
    $region9: #{_forward_impl.5} parent=5 // pred_check
      _
    $region10: #{_forward_impl.5} parent=5 // pred_check_branch
      %221 = sbr.rel (%p218) target = $region12
    $region11: #{_forward_impl.5} parent=5 // pred_region
      %s222 = ssub.s32 %s12, 1
      // Predicated region
      $region13: #{_forward_impl.5} parent=11 // pred_check
        %p223 = pneg %p76
      $region14: #{_forward_impl.5} parent=11 // pred_check_branch
        %225 = sbr.rel (%p223) target = $region16
      $region15: #{_forward_impl.5} parent=11 // pred_region
        %p226 = scmp.lt.s32.totalorder %s22, 0
        %s227 = scalar_select %p226, %s22, 0
        %s228 = smul.addr %s227, 4
        %s229 = scalar_lea.vmem %s1, %s228
      $region16: #{_forward_impl.5} parent=11 // pred_fallthru
        _
      // Predicated region
      $region17: #{_forward_impl.5} parent=11 // pred_check
        %p230 = pneg %p102
      $region18: #{_forward_impl.5} parent=11 // pred_check_branch
        %232 = sbr.rel (%p230) target = $region20
      $region19: #{_forward_impl.5} parent=11 // pred_region
        %p233 = scmp.lt.s32.totalorder %s22, 0
        %s234 = scalar_select %p233, %s22, 0
        %s235 = scalar_lea.vmem %s2, %s234
      $region20: #{_forward_impl.5} parent=11 // pred_fallthru
        _
      // Predicated region
      $region21: #{_forward_impl.5} parent=11 // pred_check
        %p236 = pneg %p154
      $region22: #{_forward_impl.5} parent=11 // pred_check_branch
        %238 = sbr.rel (%p236) target = $region24
      $region23: #{_forward_impl.5} parent=11 // pred_region
        %p239 = scmp.lt.s32.totalorder %s22, 0
        %s240 = scalar_select %p239, %s22, 0
        %s241 = smul.addr %s240, 4
        %s242 = scalar_lea.vmem %s4, %s241
      $region24: #{_forward_impl.5} parent=11 // pred_fallthru
        _
      // Predicated region
      $region25: #{_forward_impl.5} parent=11 // pred_check
        %p243 = pneg %p180
      $region26: #{_forward_impl.5} parent=11 // pred_check_branch
        %245 = sbr.rel (%p243) target = $region28
      $region27: #{_forward_impl.5} parent=11 // pred_region
        %p246 = scmp.lt.s32.totalorder %s22, 0
        %s247 = scalar_select %p246, %s22, 0
        %s248 = scalar_lea.vmem %s5, %s247
      $region28: #{_forward_impl.5} parent=11 // pred_fallthru
        _
    $region12: #{_forward_impl.5} parent=5 // pred_fallthru
      _
    %p249 = scmp.lt.s32.totalorder %s12, 2
    // Predicated region
    $region29: #{_forward_impl.5} parent=5 // pred_check
      %p250 = pneg %p249
    $region30: #{_forward_impl.5} parent=5 // pred_check_branch
      %252 = sbr.rel (%p250) target = $region32
    $region31: #{_forward_impl.5} parent=5 // pred_region
      // Predicated region
      $region33: #{_forward_impl.5} parent=31 // pred_check
        %p253 = pneg %p44
      $region34: #{_forward_impl.5} parent=31 // pred_check_branch
        %255 = sbr.rel (%p253) target = $region36
      $region35: #{_forward_impl.5} parent=31 // pred_region
        %s256 = smul.u32 2, %s19
        %p257 = scmp.lt.s32.totalorder %s256, 3
        %s258 = scalar_select %p257, %s256, 3
        %s259 = smul.addr %s258, 4
        %s260 = scalar_lea.vmem %s0, %s259
        %s261 = smul.u32 2, %s19
      $region36: #{_forward_impl.5} parent=31 // pred_fallthru
        _
      // Predicated region
      $region37: #{_forward_impl.5} parent=31 // pred_check
        %p262 = pneg %p122
      $region38: #{_forward_impl.5} parent=31 // pred_check_branch
        %264 = sbr.rel (%p262) target = $region40
      $region39: #{_forward_impl.5} parent=31 // pred_region
        %s265 = smul.u32 2, %s19
        %p266 = scmp.lt.s32.totalorder %s265, 3
        %s267 = scalar_select %p266, %s265, 3
        %s268 = smul.addr %s267, 4
        %s269 = scalar_lea.vmem %s3, %s268
        %s270 = smul.u32 2, %s19
      $region40: #{_forward_impl.5} parent=31 // pred_fallthru
        _
    $region32: #{_forward_impl.5} parent=5 // pred_fallthru
      _
    %p271 = scmp.le.s32.totalorder 1, %s12
    %p272 = scmp.lt.s32.totalorder %s12, 3
    %p273 = pnand %p271, %p272
    %p274 = pneg %p273
    // Predicated region
    $region41: #{_forward_impl.5} parent=5 // pred_check
      _
    $region42: #{_forward_impl.5} parent=5 // pred_check_branch
      %276 = sbr.rel (%p273) target = $region44
    $region43: #{_forward_impl.5} parent=5 // pred_region
      %s277 = ssub.s32 %s12, 1
      %s278 = smul.u32 2, %s21
      %p279 = scmp.lt.s32.totalorder %s278, 3
      %s280 = scalar_select %p279, %s278, 3
      %s281 = smul.addr %s280, 4
      %s282 = scalar_lea.vmem %s0, %s281
      %p283 = pneg %p50
      %p284 = pneg %p47
      %p285 = scmp.lt.s32.totalorder %s22, 0
      %s286 = scalar_select %p285, %s22, 0
      %s287 = smul.addr %s286, 4
      %s288 = scalar_lea.vmem %s1, %s287
      %p289 = pneg %p76
      %p290 = pneg %p73
      %p291 = scmp.lt.s32.totalorder %s22, 0
      %s292 = scalar_select %p291, %s22, 0
      %s293 = scalar_lea.vmem %s2, %s292
      %p294 = pneg %p102
      %p295 = pneg %p99
      %s296 = smul.u32 2, %s21
      %p297 = scmp.lt.s32.totalorder %s296, 3
      %s298 = scalar_select %p297, %s296, 3
      %s299 = smul.addr %s298, 4
      %s300 = scalar_lea.vmem %s3, %s299
      %p301 = pneg %p128
      %p302 = pneg %p125
      %p303 = scmp.lt.s32.totalorder %s22, 0
      %s304 = scalar_select %p303, %s22, 0
      %s305 = smul.addr %s304, 4
      %s306 = scalar_lea.vmem %s4, %s305
      %p307 = pneg %p154
      %p308 = pneg %p151
      %p309 = scmp.lt.s32.totalorder %s22, 0
      %s310 = scalar_select %p309, %s22, 0
      %s311 = scalar_lea.vmem %s5, %s310
      %p312 = pneg %p180
      %p313 = pneg %p177
      %p314 = pneg %p208
      %p315 = pneg %p205
      %s316 = smul.u32 2, %s21
      %p317 = scmp.lt.s32.totalorder %s316, 3
      %s318 = scalar_select %p317, %s316, 3
      %p319 = scmp.lt.s32.totalorder %s22, 0
      %s320 = scalar_select %p319, %s22, 0
      %s321 = sadd.s32 %s320, %s318
      %s322 = smul.addr %s321, 4
      %s323 = scalar_lea.vmem %s6, %s322
      %s324 = smul.u32 2, %s21
      %p325 = scmp.lt.s32.totalorder %s324, 3
      %s326 = scalar_select %p325, %s324, 3
      %s327 = smul.addr %s326, 4
      %s328 = scalar_lea.vmem %s0, %s327
      %s329 = smul.u32 2, %s21
      %p330 = scmp.lt.s32.totalorder %s22, 0
      %s331 = scalar_select %p330, %s22, 0
      %s332 = smul.addr %s331, 4
      %s333 = scalar_lea.vmem %s1, %s332
      %p334 = scmp.lt.s32.totalorder %s22, 0
      %s335 = scalar_select %p334, %s22, 0
      %s336 = scalar_lea.vmem %s2, %s335
      %s337 = smul.u32 2, %s21
      %p338 = scmp.lt.s32.totalorder %s337, 3
      %s339 = scalar_select %p338, %s337, 3
      %s340 = smul.addr %s339, 4
      %s341 = scalar_lea.vmem %s3, %s340
      %s342 = smul.u32 2, %s21
      %p343 = scmp.lt.s32.totalorder %s22, 0
      %s344 = scalar_select %p343, %s22, 0
      %s345 = smul.addr %s344, 4
      %s346 = scalar_lea.vmem %s4, %s345
      %p347 = scmp.lt.s32.totalorder %s22, 0
      %s348 = scalar_select %p347, %s22, 0
      %s349 = scalar_lea.vmem %s5, %s348
      %s350 = smul.u32 2, %s21
      %p351 = scmp.lt.s32.totalorder %s350, 3
      %s352 = scalar_select %p351, %s350, 3
      %p353 = scmp.lt.s32.totalorder %s22, 0
      %s354 = scalar_select %p353, %s22, 0
      %s355 = sadd.s32 %s354, %s352
      %s356 = smul.addr %s355, 4
      %s357 = scalar_lea.vmem %s6, %s356
      %s358 = smul.u32 2, %s21
      %v359 = vld [vmem:[%s328] sm:$0xf]
      %v360 = vld [vmem:[%s328 + $0x4] sm:$0xf]
      %v361 = vld [vmem:[%s333] sm:$0xf]
      %v362 = vld [vmem:[%s333 + $0x4] sm:$0xf]
      %v363 = vld [vmem:[%s333 + $0x8] sm:$0xf]
      %v364 = vld [vmem:[%s333 + $0xc] sm:$0xf]
      %v365 = vld [vmem:[%s333 + $0x10] sm:$0xf]
      %v366 = vld [vmem:[%s333 + $0x14] sm:$0xf]
      %v367 = vld [vmem:[%s333 + $0x18] sm:$0xf]
      %v368 = vld [vmem:[%s333 + $0x1c] sm:$0xf]
      %v369 = vld [vmem:[%s333 + $0x20] sm:$0xf]
      %v370 = vld [vmem:[%s333 + $0x24] sm:$0xf]
      %v371 = vld [vmem:[%s333 + $0x28] sm:$0xf]
      %v372 = vld [vmem:[%s333 + $0x2c] sm:$0xf]
      %v373 = vld [vmem:[%s333 + $0x30] sm:$0xf]
      %v374 = vld [vmem:[%s333 + $0x34] sm:$0xf]
      %v375 = vld [vmem:[%s333 + $0x38] sm:$0xf]
      %v376 = vld [vmem:[%s333 + $0x3c] sm:$0xf]
      %v377 = vld [vmem:[%s341] sm:$0xf]
      %v378 = vld [vmem:[%s341 + $0x4] sm:$0xf]
      %v379 = vld [vmem:[%s346] sm:$0xf]
      %v380 = vld [vmem:[%s346 + $0x4] sm:$0xf]
      %v381 = vld [vmem:[%s346 + $0x8] sm:$0xf]
      %v382 = vld [vmem:[%s346 + $0xc] sm:$0xf]
      %v383 = vld [vmem:[%s346 + $0x10] sm:$0xf]
      %v384 = vld [vmem:[%s346 + $0x14] sm:$0xf]
      %v385 = vld [vmem:[%s346 + $0x18] sm:$0xf]
      %v386 = vld [vmem:[%s346 + $0x1c] sm:$0xf]
      %v387 = vld [vmem:[%s346 + $0x20] sm:$0xf]
      %v388 = vld [vmem:[%s346 + $0x24] sm:$0xf]
      %v389 = vld [vmem:[%s346 + $0x28] sm:$0xf]
      %v390 = vld [vmem:[%s346 + $0x2c] sm:$0xf]
      %v391 = vld [vmem:[%s346 + $0x30] sm:$0xf]
      %v392 = vld [vmem:[%s346 + $0x34] sm:$0xf]
      %v393 = vld [vmem:[%s346 + $0x38] sm:$0xf]
      %v394 = vld [vmem:[%s346 + $0x3c] sm:$0xf]
      %v395 = vld [vmem:[%s336] sm:$0x1]
      %v397 = vperm.slane %v395, 0
      %v401 = vunpack.c.l.b16 %v359
      %v402 = vunpack.c.l.b16 %v360
      %v403 = vpack.c.b16 %v402, %v401
      %v421 = vunpack.c.l.b16 %v361
      %v422 = vunpack.c.l.b16 %v362
      %v423 = vunpack.c.l.b16 %v363
      %v424 = vunpack.c.l.b16 %v364
      %v425 = vunpack.c.l.b16 %v365
      %v426 = vunpack.c.l.b16 %v366
      %v427 = vunpack.c.l.b16 %v367
      %v428 = vunpack.c.l.b16 %v368
      %v429 = vunpack.c.l.b16 %v369
      %v430 = vunpack.c.l.b16 %v370
      %v431 = vunpack.c.l.b16 %v371
      %v432 = vunpack.c.l.b16 %v372
      %v433 = vunpack.c.l.b16 %v373
      %v434 = vunpack.c.l.b16 %v374
      %v435 = vunpack.c.l.b16 %v375
      %v436 = vunpack.c.l.b16 %v376
      %v437 = vpack.c.b16 %v422, %v421
      %v438 = vpack.c.b16 %v424, %v423
      %v439 = vpack.c.b16 %v426, %v425
      %v440 = vpack.c.b16 %v428, %v427
      %v441 = vpack.c.b16 %v430, %v429
      %v442 = vpack.c.b16 %v432, %v431
      %v443 = vpack.c.b16 %v434, %v433
      %v444 = vpack.c.b16 %v436, %v435
      %453 = vmatpush.bf16.msra.mxu0 %v444
      %454 = vmatpush.bf16.msra.mxu0 %v443
      %455 = vmatpush.bf16.msra.mxu0 %v442
      %456 = vmatpush.bf16.msra.mxu0 %v441
      %457 = vmatpush.bf16.msra.mxu0 %v440
      %458 = vmatpush.bf16.msra.mxu0 %v439
      %459 = vmatpush.bf16.msra.mxu0 %v438
      %460 = vmatpush.bf16.msra.mxu0 %v437
      %461 = vmatmul.bf16.gmra.mxu0 %v403
      %v462 = vpop.f32.mrf.mxu0
      %v463 = vadd.f32 %v397, %v462
      %v464 = vpop.f32.mrf.mxu0
      %v465 = vadd.f32 %v397, %v464
      %466 = vdwg.mxu0
      %v467 = vmax.f32 %v463, 0.0
      %v468 = vmax.f32 %v465, 0.0
      %v469 = vld [vmem:[%s349] sm:$0x1]
      %v471 = vperm.slane %v469, 0
      %v475 = vunpack.c.l.b16 %v377
      %v476 = vunpack.c.l.b16 %v378
      %v477 = vpack.c.b16 %v476, %v475
      %v495 = vunpack.c.l.b16 %v379
      %v496 = vunpack.c.l.b16 %v380
      %v497 = vunpack.c.l.b16 %v381
      %v498 = vunpack.c.l.b16 %v382
      %v499 = vunpack.c.l.b16 %v383
      %v500 = vunpack.c.l.b16 %v384
      %v501 = vunpack.c.l.b16 %v385
      %v502 = vunpack.c.l.b16 %v386
      %v503 = vunpack.c.l.b16 %v387
      %v504 = vunpack.c.l.b16 %v388
      %v505 = vunpack.c.l.b16 %v389
      %v506 = vunpack.c.l.b16 %v390
      %v507 = vunpack.c.l.b16 %v391
      %v508 = vunpack.c.l.b16 %v392
      %v509 = vunpack.c.l.b16 %v393
      %v510 = vunpack.c.l.b16 %v394
      %v511 = vpack.c.b16 %v496, %v495
      %v512 = vpack.c.b16 %v498, %v497
      %v513 = vpack.c.b16 %v500, %v499
      %v514 = vpack.c.b16 %v502, %v501
      %v515 = vpack.c.b16 %v504, %v503
      %v516 = vpack.c.b16 %v506, %v505
      %v517 = vpack.c.b16 %v508, %v507
      %v518 = vpack.c.b16 %v510, %v509
      %527 = vmatpush.bf16.msra.mxu0 %v518
      %528 = vmatpush.bf16.msra.mxu0 %v517
      %529 = vmatpush.bf16.msra.mxu0 %v516
      %530 = vmatpush.bf16.msra.mxu0 %v515
      %531 = vmatpush.bf16.msra.mxu0 %v514
      %532 = vmatpush.bf16.msra.mxu0 %v513
      %533 = vmatpush.bf16.msra.mxu0 %v512
      %534 = vmatpush.bf16.msra.mxu0 %v511
      %535 = vmatmul.bf16.gmra.mxu0 %v477
      %v536 = vpop.f32.mrf.mxu0
      %v537 = vadd.f32 %v471, %v536
      %v538 = vpop.f32.mrf.mxu0
      %v539 = vadd.f32 %v471, %v538
      %540 = vdwg.mxu0
      %v541 = vmax.f32 %v537, 0.0
      %v542 = vmax.f32 %v539, 0.0
      %v543 = vadd.f32 %v467, %v541
      %v544 = vadd.f32 %v468, %v542
      %v545 = vpack.c.bf16 %v543, %v543
      %v546 = vpack.c.bf16 %v544, %v544
      %547 = vst [vmem:[%s357] sm:$0xf] %v545
      %548 = vst [vmem:[%s357 + $0x4] sm:$0xf] %v546
      %s549 = smul.u32 2, %s21
      %p550 = scmp.lt.s32.totalorder %s549, 3
      %s551 = scalar_select %p550, %s549, 3
      %p552 = scmp.lt.s32.totalorder %s22, 0
      %s553 = scalar_select %p552, %s22, 0
      %s554 = sadd.s32 %s553, %s551
      %s555 = smul.addr %s554, 4
      %s556 = scalar_lea.vmem %s6, %s555
      // Predicated region
      $region45: #{_forward_impl.5} parent=43 // pred_check
        %p557 = pneg %p205
      $region46: #{_forward_impl.5} parent=43 // pred_check_branch
        %559 = sbr.rel (%p557) target = $region48
      $region47: #{_forward_impl.5} parent=43 // pred_region
        %s560 = smul.u32 2, %s21
      $region48: #{_forward_impl.5} parent=43 // pred_fallthru
        _
    $region44: #{_forward_impl.5} parent=5 // pred_fallthru
      _
    %p561 = scmp.le.s32.totalorder 2, %s12
    // Predicated region
    $region49: #{_forward_impl.5} parent=5 // pred_check
      %p562 = pneg %p561
    $region50: #{_forward_impl.5} parent=5 // pred_check_branch
      %564 = sbr.rel (%p562) target = $region52
    $region51: #{_forward_impl.5} parent=5 // pred_region
      %s565 = ssub.s32 %s12, 2
      // Predicated region
      $region53: #{_forward_impl.5} parent=51 // pred_check
        %p566 = pneg %p211
      $region54: #{_forward_impl.5} parent=51 // pred_check_branch
        %568 = sbr.rel (%p566) target = $region56
      $region55: #{_forward_impl.5} parent=51 // pred_region
        %s569 = smul.u32 2, %s23
        %p570 = scmp.lt.s32.totalorder %s569, 3
        %s571 = scalar_select %p570, %s569, 3
        %p572 = scmp.lt.s32.totalorder %s24, 0
        %s573 = scalar_select %p572, %s24, 0
        %s574 = sadd.s32 %s573, %s571
        %s575 = smul.addr %s574, 4
        %s576 = scalar_lea.vmem %s6, %s575
      $region56: #{_forward_impl.5} parent=51 // pred_fallthru
        _
    $region52: #{_forward_impl.5} parent=5 // pred_fallthru
      _
  $region6: #{_forward_impl.5} parent=0 // loop_footer
    %s16 = sadd.s32 1, %s12
  $region7: #{_forward_impl.5} parent=0 // loop_footer_branch
    %11 = sbr.rel target = $region3
  $region8: #{_forward_impl.5} parent=0 // loop_exit
    _

// kernel: _forward_impl.4
$region0: #{_forward_impl.4}
  #allocation0 [shape = 'u32[]', space=smem, size = 0x4, offset = 0x4, fixed_abs, tag = 'smem constant byte address 0x4 - core index']
  #allocation1 [shape = 'u32[72,128]{1,0:T(1,128)}', space=vmem, size = 0x9000, scoped, tag = 'internal scratch']
  #allocation2 [shape = 'f32[16,128]{1,0:T(8,128)}', space=vmem, size = 0x2000, scoped, tag = 'scratch operand']
  %s0 = inlined_call_operand.vmem [shape: bf16[2,4,5,5,128], index: 0, kind: input, shape index: {}]
  %s1 = inlined_call_operand.vmem [shape: bf16[1,9,128,128], index: 1, kind: input, shape index: {}]
  %s2 = inlined_call_operand.vmem [shape: f32[1,128], index: 2, kind: input, shape index: {}]
  %s3 = inlined_call_operand.vmem [shape: bf16[2,4,4,128], index: 3, kind: output, shape index: {}]
  %s4 = sld [smem:[#allocation0]]
  $region45: #{_forward_impl.4} parent=0
    _
  %s6 = ssub.s32 1, %s4
  %s7 = scalar_select 0, %s6, %s4
  loop: start=0, step=1, limit=4
  $region2: #{_forward_impl.4} parent=0 // loop_pre_header
    _
  $region3: #{_forward_impl.4} parent=0 // loop_header
    %s9 = sphi 0, %s13
    %p10 = scmp.ge.s32.totalorder %s9, 4
    %s16 = sphi 0, %s28
    %s17 = sphi 0, %s24
    %s18 = sphi 0, %s16
    %s19 = sphi 0, %s17
    %s20 = sphi 0, %s18
    %s21 = sphi 0, %s19
    %s33 = sphi 0, %s35
    %s36 = sphi 0, %s33
    %s37 = sphi 0, %s36
    %s53 = sphi 0, %s37
    %s59 = sphi 0, %s61
    %s62 = sphi 0, %s59
    %s63 = sphi 0, %s62
    %s79 = sphi 0, %s63
    %s85 = sphi 0, %s87
    %s88 = sphi 0, %s85
    %s89 = sphi 0, %s88
    %s105 = sphi 0, %s89
    %s113 = sphi 0, %s115
    %s116 = sphi 0, %s113
    %s117 = sphi 0, %s116
    %s133 = sphi 0, %s117
  $region4: #{_forward_impl.4} parent=0 // loop_header_branch
    %12 = sbr.rel (%p10) target = $region8
  $region5: #{_forward_impl.4} parent=0 // loop_body
    %s14 = ssub.s32 %s9, 1
    %s15 = ssub.s32 %s9, 2
    %s22 = sadd.s32 1, %s17
    %p23 = scmp.ge.s32.totalorder %s22, 1
    %s24 = scalar_select %p23, 0, %s22
    %s25 = sadd.s32 1, %s16
    %s26 = scalar_select %p23, %s25, %s16
    %p27 = scmp.ge.s32.totalorder %s26, 2
    %s28 = scalar_select %p27, 0, %s26
    %s29 = ssub.s32 %s16, %s28
    %s30 = ssub.s32 %s17, %s24
    %s31 = sor.u32 %s29, %s30
    %p32 = scmp.eq.s32.totalorder %s31, 0
    %s34 = sadd.s32 %s33, 1
    %s35 = scalar_select %p32, %s33, %s34
    %p38 = pneg %p32
    %p39 = scmp.eq.s32.totalorder %s9, 1
    %p40 = por %p38, %p39
    %p41 = scmp.ne.s32.totalorder %s33, %s36
    %p42 = scmp.eq.s32.totalorder %s9, 0
    %p43 = por %p41, %p42
    %p44 = scmp.ne.s32.totalorder %s33, %s36
    %p45 = scmp.eq.s32.totalorder %s14, 1
    %p46 = por %p44, %p45
    %p47 = scmp.ne.s32.totalorder %s36, %s37
    %p48 = scmp.eq.s32.totalorder %s14, 0
    %p49 = por %p47, %p48
    %p50 = scmp.ne.s32.totalorder %s36, %s37
    %p51 = scmp.eq.s32.totalorder %s15, 1
    %p52 = por %p50, %p51
    %p54 = scmp.ne.s32.totalorder %s37, %s53
    %p55 = scmp.eq.s32.totalorder %s15, 0
    %p56 = por %p54, %p55
    %s57 = ssub.s32 %s17, %s24
    %p58 = scmp.eq.s32.totalorder %s57, 0
    %s60 = sadd.s32 %s59, 1
    %s61 = scalar_select %p58, %s59, %s60
    %p64 = pneg %p58
    %p65 = scmp.eq.s32.totalorder %s9, 1
    %p66 = por %p64, %p65
    %p67 = scmp.ne.s32.totalorder %s59, %s62
    %p68 = scmp.eq.s32.totalorder %s9, 0
    %p69 = por %p67, %p68
    %p70 = scmp.ne.s32.totalorder %s59, %s62
    %p71 = scmp.eq.s32.totalorder %s14, 1
    %p72 = por %p70, %p71
    %p73 = scmp.ne.s32.totalorder %s62, %s63
    %p74 = scmp.eq.s32.totalorder %s14, 0
    %p75 = por %p73, %p74
    %p76 = scmp.ne.s32.totalorder %s62, %s63
    %p77 = scmp.eq.s32.totalorder %s15, 1
    %p78 = por %p76, %p77
    %p80 = scmp.ne.s32.totalorder %s63, %s79
    %p81 = scmp.eq.s32.totalorder %s15, 0
    %p82 = por %p80, %p81
    %s83 = ssub.s32 %s17, %s24
    %p84 = scmp.eq.s32.totalorder %s83, 0
    %s86 = sadd.s32 %s85, 1
    %s87 = scalar_select %p84, %s85, %s86
    %p90 = pneg %p84
    %p91 = scmp.eq.s32.totalorder %s9, 1
    %p92 = por %p90, %p91
    %p93 = scmp.ne.s32.totalorder %s85, %s88
    %p94 = scmp.eq.s32.totalorder %s9, 0
    %p95 = por %p93, %p94
    %p96 = scmp.ne.s32.totalorder %s85, %s88
    %p97 = scmp.eq.s32.totalorder %s14, 1
    %p98 = por %p96, %p97
    %p99 = scmp.ne.s32.totalorder %s88, %s89
    %p100 = scmp.eq.s32.totalorder %s14, 0
    %p101 = por %p99, %p100
    %p102 = scmp.ne.s32.totalorder %s88, %s89
    %p103 = scmp.eq.s32.totalorder %s15, 1
    %p104 = por %p102, %p103
    %p106 = scmp.ne.s32.totalorder %s89, %s105
    %p107 = scmp.eq.s32.totalorder %s15, 0
    %p108 = por %p106, %p107
    %s109 = ssub.s32 %s16, %s28
    %s110 = ssub.s32 %s17, %s24
    %s111 = sor.u32 %s109, %s110
    %p112 = scmp.eq.s32.totalorder %s111, 0
    %s114 = sadd.s32 %s113, 1
    %s115 = scalar_select %p112, %s113, %s114
    %p118 = pneg %p112
    %p119 = scmp.eq.s32.totalorder %s9, 1
    %p120 = por %p118, %p119
    %p121 = scmp.ne.s32.totalorder %s113, %s116
    %p122 = scmp.eq.s32.totalorder %s9, 0
    %p123 = por %p121, %p122
    %p124 = scmp.ne.s32.totalorder %s113, %s116
    %p125 = scmp.eq.s32.totalorder %s14, 1
    %p126 = por %p124, %p125
    %p127 = scmp.ne.s32.totalorder %s116, %s117
    %p128 = scmp.eq.s32.totalorder %s14, 0
    %p129 = por %p127, %p128
    %p130 = scmp.ne.s32.totalorder %s116, %s117
    %p131 = scmp.eq.s32.totalorder %s15, 1
    %p132 = por %p130, %p131
    %p134 = scmp.ne.s32.totalorder %s117, %s133
    %p135 = scmp.eq.s32.totalorder %s15, 0
    %p136 = por %p134, %p135
    %p137 = scmp.le.s32.totalorder 1, %s9
    %p138 = scmp.lt.s32.totalorder %s9, 3
    %p139 = pnand %p137, %p138
    %p140 = pneg %p139
    // Predicated region
    $region9: #{_forward_impl.4} parent=5 // pred_check
      _
    $region10: #{_forward_impl.4} parent=5 // pred_check_branch
      %142 = sbr.rel (%p139) target = $region12
    $region11: #{_forward_impl.4} parent=5 // pred_region
      %s143 = ssub.s32 %s9, 1
      // Predicated region
      $region13: #{_forward_impl.4} parent=11 // pred_check
        %p144 = pneg %p75
      $region14: #{_forward_impl.4} parent=11 // pred_check_branch
        %146 = sbr.rel (%p144) target = $region16
      $region15: #{_forward_impl.4} parent=11 // pred_region
        %p147 = scmp.lt.s32.totalorder %s19, 0
        %s148 = scalar_select %p147, %s19, 0
        %s149 = smul.addr %s148, 144
        %s150 = smul.addr %s149, 4
        %s151 = scalar_lea.vmem %s1, %s150
      $region16: #{_forward_impl.4} parent=11 // pred_fallthru
        _
      // Predicated region
      $region17: #{_forward_impl.4} parent=11 // pred_check
        %p152 = pneg %p101
      $region18: #{_forward_impl.4} parent=11 // pred_check_branch
        %154 = sbr.rel (%p152) target = $region20
      $region19: #{_forward_impl.4} parent=11 // pred_region
        %p155 = scmp.lt.s32.totalorder %s19, 0
        %s156 = scalar_select %p155, %s19, 0
        %s157 = scalar_lea.vmem %s2, %s156
      $region20: #{_forward_impl.4} parent=11 // pred_fallthru
        _
    $region12: #{_forward_impl.4} parent=5 // pred_fallthru
      _
    %p158 = scmp.lt.s32.totalorder %s9, 2
    // Predicated region
    $region21: #{_forward_impl.4} parent=5 // pred_check
      %p159 = pneg %p158
    $region22: #{_forward_impl.4} parent=5 // pred_check_branch
      %161 = sbr.rel (%p159) target = $region24
    $region23: #{_forward_impl.4} parent=5 // pred_region
      // Predicated region
      $region25: #{_forward_impl.4} parent=23 // pred_check
        %p162 = pneg %p43
      $region26: #{_forward_impl.4} parent=23 // pred_check_branch
        %164 = sbr.rel (%p162) target = $region28
      $region27: #{_forward_impl.4} parent=23 // pred_region
        %p165 = scmp.lt.s32.totalorder %s16, 1
        %s166 = scalar_select %p165, %s16, 1
        %p167 = scmp.lt.s32.totalorder %s17, 0
        %s168 = scalar_select %p167, %s17, 0
        %s169 = smul.addr %s166, 20
        %s170 = sadd.s32 %s168, %s169
        %s171 = smul.addr %s170, 4
        %s172 = scalar_lea.vmem %s0, %s171
      $region28: #{_forward_impl.4} parent=23 // pred_fallthru
        _
    $region24: #{_forward_impl.4} parent=5 // pred_fallthru
      _
    %p173 = scmp.le.s32.totalorder 1, %s9
    %p174 = scmp.lt.s32.totalorder %s9, 3
    %p175 = pnand %p173, %p174
    %p176 = pneg %p175
    // Predicated region
    $region29: #{_forward_impl.4} parent=5 // pred_check
      _
    $region30: #{_forward_impl.4} parent=5 // pred_check_branch
      %178 = sbr.rel (%p175) target = $region32
    $region31: #{_forward_impl.4} parent=5 // pred_region
      %s179 = ssub.s32 %s9, 1
      %p180 = scmp.lt.s32.totalorder %s18, 1
      %s181 = scalar_select %p180, %s18, 1
      %p182 = scmp.lt.s32.totalorder %s19, 0
      %s183 = scalar_select %p182, %s19, 0
      %s184 = smul.addr %s181, 20
      %s185 = sadd.s32 %s183, %s184
      %s186 = smul.addr %s185, 4
      %s187 = scalar_lea.vmem %s0, %s186
      %p188 = pneg %p49
      %p189 = pneg %p46
      %p190 = scmp.lt.s32.totalorder %s19, 0
      %s191 = scalar_select %p190, %s19, 0
      %s192 = smul.addr %s191, 144
      %s193 = smul.addr %s192, 4
      %s194 = scalar_lea.vmem %s1, %s193
      %p195 = pneg %p75
      %p196 = pneg %p72
      %p197 = scmp.lt.s32.totalorder %s19, 0
      %s198 = scalar_select %p197, %s19, 0
      %s199 = scalar_lea.vmem %s2, %s198
      %p200 = pneg %p101
      %p201 = pneg %p98
      %p202 = pneg %p129
      %p203 = pneg %p126
      %p204 = scmp.lt.s32.totalorder %s18, 1
      %s205 = scalar_select %p204, %s18, 1
      %p206 = scmp.lt.s32.totalorder %s19, 0
      %s207 = scalar_select %p206, %s19, 0
      %s208 = smul.addr %s205, 4
      %s209 = sadd.s32 %s207, %s208
      %s210 = smul.addr %s209, 2
      %s211 = scalar_lea.vmem %s3, %s210
      %p212 = scmp.lt.s32.totalorder %s18, 1
      %s213 = scalar_select %p212, %s18, 1
      %p214 = scmp.lt.s32.totalorder %s19, 0
      %s215 = scalar_select %p214, %s19, 0
      %s216 = smul.addr %s213, 20
      %s217 = sadd.s32 %s215, %s216
      %s218 = smul.addr %s217, 4
      %s219 = scalar_lea.vmem %s0, %s218
      %p220 = scmp.lt.s32.totalorder %s19, 0
      %s221 = scalar_select %p220, %s19, 0
      %s222 = smul.addr %s221, 144
      %s223 = smul.addr %s222, 4
      %s224 = scalar_lea.vmem %s1, %s223
      %p225 = scmp.lt.s32.totalorder %s19, 0
      %s226 = scalar_select %p225, %s19, 0
      %s227 = scalar_lea.vmem %s2, %s226
      %p228 = scmp.lt.s32.totalorder %s18, 1
      %s229 = scalar_select %p228, %s18, 1
      %p230 = scmp.lt.s32.totalorder %s19, 0
      %s231 = scalar_select %p230, %s19, 0
      %s232 = smul.addr %s229, 4
      %s233 = sadd.s32 %s231, %s232
      %s234 = smul.addr %s233, 2
      %s235 = scalar_lea.vmem %s3, %s234
      %236 = vst [vmem:[#allocation2] sm:$0xff] 0.0
      %237 = vst [vmem:[#allocation2 + $0x8] sm:$0xff] 0.0
      %v238 = vld [vmem:[%s219] sm:$0x3]
      %v239 = vld [vmem:[%s219 + $0x4] sm:$0x3]
      %v240 = vld [vmem:[%s219 + $0x8] sm:$0x3]
      %v241 = vld [vmem:[%s219 + $0xc] sm:$0x3]
      %v242 = vld [vmem:[#allocation2] sm:$0xff]
      %v243 = vld [vmem:[#allocation2 + $0x8] sm:$0xff]
      %v244 = vld [vmem:[%s224] sm:$0xf]
      %v245 = vld [vmem:[%s224 + $0x4] sm:$0xf]
      %v246 = vld [vmem:[%s224 + $0x8] sm:$0xf]
      %v247 = vld [vmem:[%s224 + $0xc] sm:$0xf]
      %v248 = vld [vmem:[%s224 + $0x10] sm:$0xf]
      %v249 = vld [vmem:[%s224 + $0x14] sm:$0xf]
      %v250 = vld [vmem:[%s224 + $0x18] sm:$0xf]
      %v251 = vld [vmem:[%s224 + $0x1c] sm:$0xf]
      %v252 = vld [vmem:[%s224 + $0x20] sm:$0xf]
      %v253 = vld [vmem:[%s224 + $0x24] sm:$0xf]
      %v254 = vld [vmem:[%s224 + $0x28] sm:$0xf]
      %v255 = vld [vmem:[%s224 + $0x2c] sm:$0xf]
      %v256 = vld [vmem:[%s224 + $0x30] sm:$0xf]
      %v257 = vld [vmem:[%s224 + $0x34] sm:$0xf]
      %v258 = vld [vmem:[%s224 + $0x38] sm:$0xf]
      %v259 = vld [vmem:[%s224 + $0x3c] sm:$0xf]
      %261 = vst [vmem:[#allocation1] ss:$4 sm:$0xff] %v238
      %s263 = scalar_lea.vmem [#allocation1], 1
      %264 = vst [vmem:[%s263] ss:$4 sm:$0xff] %v239
      %s266 = scalar_lea.vmem [#allocation1], 2
      %267 = vst [vmem:[%s266] ss:$4 sm:$0xff] %v240
      %s269 = scalar_lea.vmem [#allocation1], 3
      %270 = vst [vmem:[%s269] ss:$4 sm:$0xff] %v241
      %v271 = vld.sshfl [vmem:[#allocation1] sm:$0xff pattern:$0x73625140]
      %v289 = vunpack.c.l.b16 %v244
      %v290 = vunpack.c.l.b16 %v245
      %v291 = vunpack.c.l.b16 %v246
      %v292 = vunpack.c.l.b16 %v247
      %v293 = vunpack.c.l.b16 %v248
      %v294 = vunpack.c.l.b16 %v249
      %v295 = vunpack.c.l.b16 %v250
      %v296 = vunpack.c.l.b16 %v251
      %v297 = vunpack.c.l.b16 %v252
      %v298 = vunpack.c.l.b16 %v253
      %v299 = vunpack.c.l.b16 %v254
      %v300 = vunpack.c.l.b16 %v255
      %v301 = vunpack.c.l.b16 %v256
      %v302 = vunpack.c.l.b16 %v257
      %v303 = vunpack.c.l.b16 %v258
      %v304 = vunpack.c.l.b16 %v259
      %v305 = vpack.c.b16 %v290, %v289
      %v306 = vpack.c.b16 %v292, %v291
      %v307 = vpack.c.b16 %v294, %v293
      %v308 = vpack.c.b16 %v296, %v295
      %v309 = vpack.c.b16 %v298, %v297
      %v310 = vpack.c.b16 %v300, %v299
      %v311 = vpack.c.b16 %v302, %v301
      %v312 = vpack.c.b16 %v304, %v303
      %321 = vmatpush.bf16.msra.mxu0 %v312
      %322 = vmatpush.bf16.msra.mxu0 %v311
      %323 = vmatpush.bf16.msra.mxu0 %v310
      %324 = vmatpush.bf16.msra.mxu0 %v309
      %325 = vmatpush.bf16.msra.mxu0 %v308
      %326 = vmatpush.bf16.msra.mxu0 %v307
      %327 = vmatpush.bf16.msra.mxu0 %v306
      %328 = vmatpush.bf16.msra.mxu0 %v305
      %329 = vmatmul.bf16.gmra.mxu0 %v271
      %v330 = vpop.f32.mrf.mxu0
      %v331 = vadd.f32 0.0, %v330
      %v332 = vpop.f32.mrf.mxu0
      %v333 = vadd.f32 0.0, %v332
      %334 = vdwg.mxu0
      %v335 = vadd.f32 %v242, %v331
      %v336 = vadd.f32 %v243, %v333
      %337 = vst [vmem:[#allocation2] sm:$0xff] %v335
      %338 = vst [vmem:[#allocation2 + $0x8] sm:$0xff] %v336
      %s339 = scalar_lea.vmem %s219, 20
      %v340 = vld [vmem:[%s339] sm:$0x3]
      %v341 = vld [vmem:[%s339 + $0x4] sm:$0x3]
      %v342 = vld [vmem:[%s339 + $0x8] sm:$0x3]
      %v343 = vld [vmem:[%s339 + $0xc] sm:$0x3]
      %v344 = vld [vmem:[#allocation2] sm:$0xff]
      %v345 = vld [vmem:[#allocation2 + $0x8] sm:$0xff]
      %s346 = scalar_lea.vmem %s224, 64
      %v347 = vld [vmem:[%s346] sm:$0xf]
      %v348 = vld [vmem:[%s346 + $0x4] sm:$0xf]
      %v349 = vld [vmem:[%s346 + $0x8] sm:$0xf]
      %v350 = vld [vmem:[%s346 + $0xc] sm:$0xf]
      %v351 = vld [vmem:[%s346 + $0x10] sm:$0xf]
      %v352 = vld [vmem:[%s346 + $0x14] sm:$0xf]
      %v353 = vld [vmem:[%s346 + $0x18] sm:$0xf]
      %v354 = vld [vmem:[%s346 + $0x1c] sm:$0xf]
      %v355 = vld [vmem:[%s346 + $0x20] sm:$0xf]
      %v356 = vld [vmem:[%s346 + $0x24] sm:$0xf]
      %v357 = vld [vmem:[%s346 + $0x28] sm:$0xf]
      %v358 = vld [vmem:[%s346 + $0x2c] sm:$0xf]
      %v359 = vld [vmem:[%s346 + $0x30] sm:$0xf]
      %v360 = vld [vmem:[%s346 + $0x34] sm:$0xf]
      %v361 = vld [vmem:[%s346 + $0x38] sm:$0xf]
      %v362 = vld [vmem:[%s346 + $0x3c] sm:$0xf]
      %364 = vst [vmem:[#allocation1] ss:$4 sm:$0xff] %v340
      %s366 = scalar_lea.vmem [#allocation1], 1
      %367 = vst [vmem:[%s366] ss:$4 sm:$0xff] %v341
      %s369 = scalar_lea.vmem [#allocation1], 2
      %370 = vst [vmem:[%s369] ss:$4 sm:$0xff] %v342
      %s372 = scalar_lea.vmem [#allocation1], 3
      %373 = vst [vmem:[%s372] ss:$4 sm:$0xff] %v343
      %v374 = vld.sshfl [vmem:[#allocation1] sm:$0xff pattern:$0x73625140]
      %v392 = vunpack.c.l.b16 %v347
      %v393 = vunpack.c.l.b16 %v348
      %v394 = vunpack.c.l.b16 %v349
      %v395 = vunpack.c.l.b16 %v350
      %v396 = vunpack.c.l.b16 %v351
      %v397 = vunpack.c.l.b16 %v352
      %v398 = vunpack.c.l.b16 %v353
      %v399 = vunpack.c.l.b16 %v354
      %v400 = vunpack.c.l.b16 %v355
      %v401 = vunpack.c.l.b16 %v356
      %v402 = vunpack.c.l.b16 %v357
      %v403 = vunpack.c.l.b16 %v358
      %v404 = vunpack.c.l.b16 %v359
      %v405 = vunpack.c.l.b16 %v360
      %v406 = vunpack.c.l.b16 %v361
      %v407 = vunpack.c.l.b16 %v362
      %v408 = vpack.c.b16 %v393, %v392
      %v409 = vpack.c.b16 %v395, %v394
      %v410 = vpack.c.b16 %v397, %v396
      %v411 = vpack.c.b16 %v399, %v398
      %v412 = vpack.c.b16 %v401, %v400
      %v413 = vpack.c.b16 %v403, %v402
      %v414 = vpack.c.b16 %v405, %v404
      %v415 = vpack.c.b16 %v407, %v406
      %424 = vmatpush.bf16.msra.mxu0 %v415
      %425 = vmatpush.bf16.msra.mxu0 %v414
      %426 = vmatpush.bf16.msra.mxu0 %v413
      %427 = vmatpush.bf16.msra.mxu0 %v412
      %428 = vmatpush.bf16.msra.mxu0 %v411
      %429 = vmatpush.bf16.msra.mxu0 %v410
      %430 = vmatpush.bf16.msra.mxu0 %v409
      %431 = vmatpush.bf16.msra.mxu0 %v408
      %432 = vmatmul.bf16.gmra.mxu0 %v374
      %v433 = vpop.f32.mrf.mxu0
      %v434 = vadd.f32 0.0, %v433
      %v435 = vpop.f32.mrf.mxu0
      %v436 = vadd.f32 0.0, %v435
      %437 = vdwg.mxu0
      %v438 = vadd.f32 %v344, %v434
      %v439 = vadd.f32 %v345, %v436
      %440 = vst [vmem:[#allocation2] sm:$0xff] %v438
      %441 = vst [vmem:[#allocation2 + $0x8] sm:$0xff] %v439
      %v442 = vld [vmem:[%s219] sm:$0x7]
      %v443 = vld [vmem:[%s219 + $0x4] sm:$0x7]
      %v444 = vld [vmem:[%s219 + $0x8] sm:$0x7]
      %v445 = vld [vmem:[%s219 + $0xc] sm:$0x7]
      %v446 = vld [vmem:[#allocation2] sm:$0xff]
      %v447 = vld [vmem:[#allocation2 + $0x8] sm:$0xff]
      %v452 = vrot.slane %v442, 2
      %v453 = vrot.slane %v443, 2
      %v454 = vrot.slane %v444, 2
      %v455 = vrot.slane %v445, 2
      %vm456 = vcmask 1041408
      %v459 = vsel %vm456, %v442, %v452
      %vm460 = vcmask 1043458
      %v461 = vsel %vm460, %v442, %v452
      %v463 = vrot.slane %v461, 2
      %v466 = vsel %vm456, %v443, %v453
      %v467 = vsel %vm460, %v443, %v453
      %v469 = vrot.slane %v467, 2
      %v472 = vsel %vm456, %v444, %v454
      %v473 = vsel %vm460, %v444, %v454
      %v475 = vrot.slane %v473, 2
      %v478 = vsel %vm456, %v445, %v455
      %v479 = vsel %vm460, %v445, %v455
      %v481 = vrot.slane %v479, 2
      %vm482 = vsmask.f32 1280
      %vm483 = vsmask.f32 3336
      %vm484 = vmor %vm482, %vm483
      %vm485 = vsmask.f32 5392
      %vm486 = vmor %vm484, %vm485
      %vm487 = vsmask.f32 7448
      %vm488 = vmor %vm486, %vm487
      %v489 = vshrl.u32 %v459, 16
      %v491 = vrot.slane %v489, 6
      %v492 = vshll.u32 %v459, 16
      %v494 = vrot.slane %v492, 7
      %v495 = vor.u32 %v491, %v494
      %v496 = vrot.slane %v495, 2
      %v498 = vshll.u32 %v463, 16
      %v500 = vrot.slane %v498, 7
      %v501 = vsel %vm488, %v496, %v500
      %v502 = vshrl.u32 %v466, 16
      %v504 = vrot.slane %v502, 6
      %v505 = vshll.u32 %v466, 16
      %v507 = vrot.slane %v505, 7
      %v508 = vor.u32 %v504, %v507
      %v509 = vrot.slane %v508, 2
      %v511 = vshll.u32 %v469, 16
      %v513 = vrot.slane %v511, 7
      %v514 = vsel %vm488, %v509, %v513
      %v515 = vshrl.u32 %v472, 16
      %v517 = vrot.slane %v515, 6
      %v518 = vshll.u32 %v472, 16
      %v520 = vrot.slane %v518, 7
      %v521 = vor.u32 %v517, %v520
      %v522 = vrot.slane %v521, 2
      %v524 = vshll.u32 %v475, 16
      %v526 = vrot.slane %v524, 7
      %v527 = vsel %vm488, %v522, %v526
      %v528 = vshrl.u32 %v478, 16
      %v530 = vrot.slane %v528, 6
      %v531 = vshll.u32 %v478, 16
      %v533 = vrot.slane %v531, 7
      %v534 = vor.u32 %v530, %v533
      %v535 = vrot.slane %v534, 2
      %v537 = vshll.u32 %v481, 16
      %v539 = vrot.slane %v537, 7
      %v540 = vsel %vm488, %v535, %v539
      %s541 = scalar_lea.vmem %s224, 128
      %v542 = vld [vmem:[%s541] sm:$0xf]
      %v543 = vld [vmem:[%s541 + $0x4] sm:$0xf]
      %v544 = vld [vmem:[%s541 + $0x8] sm:$0xf]
      %v545 = vld [vmem:[%s541 + $0xc] sm:$0xf]
      %v546 = vld [vmem:[%s541 + $0x10] sm:$0xf]
      %v547 = vld [vmem:[%s541 + $0x14] sm:$0xf]
      %v548 = vld [vmem:[%s541 + $0x18] sm:$0xf]
      %v549 = vld [vmem:[%s541 + $0x1c] sm:$0xf]
      %v550 = vld [vmem:[%s541 + $0x20] sm:$0xf]
      %v551 = vld [vmem:[%s541 + $0x24] sm:$0xf]
      %v552 = vld [vmem:[%s541 + $0x28] sm:$0xf]
      %v553 = vld [vmem:[%s541 + $0x2c] sm:$0xf]
      %v554 = vld [vmem:[%s541 + $0x30] sm:$0xf]
      %v555 = vld [vmem:[%s541 + $0x34] sm:$0xf]
      %v556 = vld [vmem:[%s541 + $0x38] sm:$0xf]
      %v557 = vld [vmem:[%s541 + $0x3c] sm:$0xf]
      %559 = vst [vmem:[#allocation1] ss:$4 sm:$0xff] %v501
      %s561 = scalar_lea.vmem [#allocation1], 1
      %562 = vst [vmem:[%s561] ss:$4 sm:$0xff] %v514
      %s564 = scalar_lea.vmem [#allocation1], 2
      %565 = vst [vmem:[%s564] ss:$4 sm:$0xff] %v527
      %s567 = scalar_lea.vmem [#allocation1], 3
      %568 = vst [vmem:[%s567] ss:$4 sm:$0xff] %v540
      %v569 = vld.sshfl [vmem:[#allocation1] sm:$0xff pattern:$0x73625140]
      %v587 = vunpack.c.l.b16 %v542
      %v588 = vunpack.c.l.b16 %v543
      %v589 = vunpack.c.l.b16 %v544
      %v590 = vunpack.c.l.b16 %v545
      %v591 = vunpack.c.l.b16 %v546
      %v592 = vunpack.c.l.b16 %v547
      %v593 = vunpack.c.l.b16 %v548
      %v594 = vunpack.c.l.b16 %v549
      %v595 = vunpack.c.l.b16 %v550
      %v596 = vunpack.c.l.b16 %v551
      %v597 = vunpack.c.l.b16 %v552
      %v598 = vunpack.c.l.b16 %v553
      %v599 = vunpack.c.l.b16 %v554
      %v600 = vunpack.c.l.b16 %v555
      %v601 = vunpack.c.l.b16 %v556
      %v602 = vunpack.c.l.b16 %v557
      %v603 = vpack.c.b16 %v588, %v587
      %v604 = vpack.c.b16 %v590, %v589
      %v605 = vpack.c.b16 %v592, %v591
      %v606 = vpack.c.b16 %v594, %v593
      %v607 = vpack.c.b16 %v596, %v595
      %v608 = vpack.c.b16 %v598, %v597
      %v609 = vpack.c.b16 %v600, %v599
      %v610 = vpack.c.b16 %v602, %v601
      %619 = vmatpush.bf16.msra.mxu0 %v610
      %620 = vmatpush.bf16.msra.mxu0 %v609
      %621 = vmatpush.bf16.msra.mxu0 %v608
      %622 = vmatpush.bf16.msra.mxu0 %v607
      %623 = vmatpush.bf16.msra.mxu0 %v606
      %624 = vmatpush.bf16.msra.mxu0 %v605
      %625 = vmatpush.bf16.msra.mxu0 %v604
      %626 = vmatpush.bf16.msra.mxu0 %v603
      %627 = vmatmul.bf16.gmra.mxu0 %v569
      %v628 = vpop.f32.mrf.mxu0
      %v629 = vadd.f32 0.0, %v628
      %v630 = vpop.f32.mrf.mxu0
      %v631 = vadd.f32 0.0, %v630
      %632 = vdwg.mxu0
      %v633 = vadd.f32 %v446, %v629
      %v634 = vadd.f32 %v447, %v631
      %635 = vst [vmem:[#allocation2] sm:$0xff] %v633
      %636 = vst [vmem:[#allocation2 + $0x8] sm:$0xff] %v634
      %s637 = scalar_lea.vmem %s219, 40
      %v638 = vld [vmem:[%s637] sm:$0x3]
      %v639 = vld [vmem:[%s637 + $0x4] sm:$0x3]
      %v640 = vld [vmem:[%s637 + $0x8] sm:$0x3]
      %v641 = vld [vmem:[%s637 + $0xc] sm:$0x3]
      %v642 = vld [vmem:[#allocation2] sm:$0xff]
      %v643 = vld [vmem:[#allocation2 + $0x8] sm:$0xff]
      %s644 = scalar_lea.vmem %s224, 192
      %v645 = vld [vmem:[%s644] sm:$0xf]
      %v646 = vld [vmem:[%s644 + $0x4] sm:$0xf]
      %v647 = vld [vmem:[%s644 + $0x8] sm:$0xf]
      %v648 = vld [vmem:[%s644 + $0xc] sm:$0xf]
      %v649 = vld [vmem:[%s644 + $0x10] sm:$0xf]
      %v650 = vld [vmem:[%s644 + $0x14] sm:$0xf]
      %v651 = vld [vmem:[%s644 + $0x18] sm:$0xf]
      %v652 = vld [vmem:[%s644 + $0x1c] sm:$0xf]
      %v653 = vld [vmem:[%s644 + $0x20] sm:$0xf]
      %v654 = vld [vmem:[%s644 + $0x24] sm:$0xf]
      %v655 = vld [vmem:[%s644 + $0x28] sm:$0xf]
      %v656 = vld [vmem:[%s644 + $0x2c] sm:$0xf]
      %v657 = vld [vmem:[%s644 + $0x30] sm:$0xf]
      %v658 = vld [vmem:[%s644 + $0x34] sm:$0xf]
      %v659 = vld [vmem:[%s644 + $0x38] sm:$0xf]
      %v660 = vld [vmem:[%s644 + $0x3c] sm:$0xf]
      %662 = vst [vmem:[#allocation1] ss:$4 sm:$0xff] %v638
      %s664 = scalar_lea.vmem [#allocation1], 1
      %665 = vst [vmem:[%s664] ss:$4 sm:$0xff] %v639
      %s667 = scalar_lea.vmem [#allocation1], 2
      %668 = vst [vmem:[%s667] ss:$4 sm:$0xff] %v640
      %s670 = scalar_lea.vmem [#allocation1], 3
      %671 = vst [vmem:[%s670] ss:$4 sm:$0xff] %v641
      %v672 = vld.sshfl [vmem:[#allocation1] sm:$0xff pattern:$0x73625140]
      %v690 = vunpack.c.l.b16 %v645
      %v691 = vunpack.c.l.b16 %v646
      %v692 = vunpack.c.l.b16 %v647
      %v693 = vunpack.c.l.b16 %v648
      %v694 = vunpack.c.l.b16 %v649
      %v695 = vunpack.c.l.b16 %v650
      %v696 = vunpack.c.l.b16 %v651
      %v697 = vunpack.c.l.b16 %v652
      %v698 = vunpack.c.l.b16 %v653
      %v699 = vunpack.c.l.b16 %v654
      %v700 = vunpack.c.l.b16 %v655
      %v701 = vunpack.c.l.b16 %v656
      %v702 = vunpack.c.l.b16 %v657
      %v703 = vunpack.c.l.b16 %v658
      %v704 = vunpack.c.l.b16 %v659
      %v705 = vunpack.c.l.b16 %v660
      %v706 = vpack.c.b16 %v691, %v690
      %v707 = vpack.c.b16 %v693, %v692
      %v708 = vpack.c.b16 %v695, %v694
      %v709 = vpack.c.b16 %v697, %v696
      %v710 = vpack.c.b16 %v699, %v698
      %v711 = vpack.c.b16 %v701, %v700
      %v712 = vpack.c.b16 %v703, %v702
      %v713 = vpack.c.b16 %v705, %v704
      %722 = vmatpush.bf16.msra.mxu0 %v713
      %723 = vmatpush.bf16.msra.mxu0 %v712
      %724 = vmatpush.bf16.msra.mxu0 %v711
      %725 = vmatpush.bf16.msra.mxu0 %v710
      %726 = vmatpush.bf16.msra.mxu0 %v709
      %727 = vmatpush.bf16.msra.mxu0 %v708
      %728 = vmatpush.bf16.msra.mxu0 %v707
      %729 = vmatpush.bf16.msra.mxu0 %v706
      %730 = vmatmul.bf16.gmra.mxu0 %v672
      %v731 = vpop.f32.mrf.mxu0
      %v732 = vadd.f32 0.0, %v731
      %v733 = vpop.f32.mrf.mxu0
      %v734 = vadd.f32 0.0, %v733
      %735 = vdwg.mxu0
      %v736 = vadd.f32 %v642, %v732
      %v737 = vadd.f32 %v643, %v734
      %738 = vst [vmem:[#allocation2] sm:$0xff] %v736
      %739 = vst [vmem:[#allocation2 + $0x8] sm:$0xff] %v737
      %s740 = scalar_lea.vmem %s219, 60
      %v741 = vld [vmem:[%s740] sm:$0x3]
      %v742 = vld [vmem:[%s740 + $0x4] sm:$0x3]
      %v743 = vld [vmem:[%s740 + $0x8] sm:$0x3]
      %v744 = vld [vmem:[%s740 + $0xc] sm:$0x3]
      %v745 = vld [vmem:[#allocation2] sm:$0xff]
      %v746 = vld [vmem:[#allocation2 + $0x8] sm:$0xff]
      %s747 = scalar_lea.vmem %s224, 256
      %v748 = vld [vmem:[%s747] sm:$0xf]
      %v749 = vld [vmem:[%s747 + $0x4] sm:$0xf]
      %v750 = vld [vmem:[%s747 + $0x8] sm:$0xf]
      %v751 = vld [vmem:[%s747 + $0xc] sm:$0xf]
      %v752 = vld [vmem:[%s747 + $0x10] sm:$0xf]
      %v753 = vld [vmem:[%s747 + $0x14] sm:$0xf]
      %v754 = vld [vmem:[%s747 + $0x18] sm:$0xf]
      %v755 = vld [vmem:[%s747 + $0x1c] sm:$0xf]
      %v756 = vld [vmem:[%s747 + $0x20] sm:$0xf]
      %v757 = vld [vmem:[%s747 + $0x24] sm:$0xf]
      %v758 = vld [vmem:[%s747 + $0x28] sm:$0xf]
      %v759 = vld [vmem:[%s747 + $0x2c] sm:$0xf]
      %v760 = vld [vmem:[%s747 + $0x30] sm:$0xf]
      %v761 = vld [vmem:[%s747 + $0x34] sm:$0xf]
      %v762 = vld [vmem:[%s747 + $0x38] sm:$0xf]
      %v763 = vld [vmem:[%s747 + $0x3c] sm:$0xf]
      %765 = vst [vmem:[#allocation1] ss:$4 sm:$0xff] %v741
      %s767 = scalar_lea.vmem [#allocation1], 1
      %768 = vst [vmem:[%s767] ss:$4 sm:$0xff] %v742
      %s770 = scalar_lea.vmem [#allocation1], 2
      %771 = vst [vmem:[%s770] ss:$4 sm:$0xff] %v743
      %s773 = scalar_lea.vmem [#allocation1], 3
      %774 = vst [vmem:[%s773] ss:$4 sm:$0xff] %v744
      %v775 = vld.sshfl [vmem:[#allocation1] sm:$0xff pattern:$0x73625140]
      %v793 = vunpack.c.l.b16 %v748
      %v794 = vunpack.c.l.b16 %v749
      %v795 = vunpack.c.l.b16 %v750
      %v796 = vunpack.c.l.b16 %v751
      %v797 = vunpack.c.l.b16 %v752
      %v798 = vunpack.c.l.b16 %v753
      %v799 = vunpack.c.l.b16 %v754
      %v800 = vunpack.c.l.b16 %v755
      %v801 = vunpack.c.l.b16 %v756
      %v802 = vunpack.c.l.b16 %v757
      %v803 = vunpack.c.l.b16 %v758
      %v804 = vunpack.c.l.b16 %v759
      %v805 = vunpack.c.l.b16 %v760
      %v806 = vunpack.c.l.b16 %v761
      %v807 = vunpack.c.l.b16 %v762
      %v808 = vunpack.c.l.b16 %v763
      %v809 = vpack.c.b16 %v794, %v793
      %v810 = vpack.c.b16 %v796, %v795
      %v811 = vpack.c.b16 %v798, %v797
      %v812 = vpack.c.b16 %v800, %v799
      %v813 = vpack.c.b16 %v802, %v801
      %v814 = vpack.c.b16 %v804, %v803
      %v815 = vpack.c.b16 %v806, %v805
      %v816 = vpack.c.b16 %v808, %v807
      %825 = vmatpush.bf16.msra.mxu0 %v816
      %826 = vmatpush.bf16.msra.mxu0 %v815
      %827 = vmatpush.bf16.msra.mxu0 %v814
      %828 = vmatpush.bf16.msra.mxu0 %v813
      %829 = vmatpush.bf16.msra.mxu0 %v812
      %830 = vmatpush.bf16.msra.mxu0 %v811
      %831 = vmatpush.bf16.msra.mxu0 %v810
      %832 = vmatpush.bf16.msra.mxu0 %v809
      %833 = vmatmul.bf16.gmra.mxu0 %v775
      %v834 = vpop.f32.mrf.mxu0
      %v835 = vadd.f32 0.0, %v834
      %v836 = vpop.f32.mrf.mxu0
      %v837 = vadd.f32 0.0, %v836
      %838 = vdwg.mxu0
      %v839 = vadd.f32 %v745, %v835
      %v840 = vadd.f32 %v746, %v837
      %841 = vst [vmem:[#allocation2] sm:$0xff] %v839
      %842 = vst [vmem:[#allocation2 + $0x8] sm:$0xff] %v840
      %v843 = vld [vmem:[%s637] sm:$0x7]
      %v844 = vld [vmem:[%s637 + $0x4] sm:$0x7]
      %v845 = vld [vmem:[%s637 + $0x8] sm:$0x7]
      %v846 = vld [vmem:[%s637 + $0xc] sm:$0x7]
      %v847 = vld [vmem:[#allocation2] sm:$0xff]
      %v848 = vld [vmem:[#allocation2 + $0x8] sm:$0xff]
      %v853 = vrot.slane %v843, 2
      %v854 = vrot.slane %v844, 2
      %v855 = vrot.slane %v845, 2
      %v856 = vrot.slane %v846, 2
      %v859 = vsel %vm456, %v843, %v853
      %v860 = vsel %vm460, %v843, %v853
      %v862 = vrot.slane %v860, 2
      %v865 = vsel %vm456, %v844, %v854
      %v866 = vsel %vm460, %v844, %v854
      %v868 = vrot.slane %v866, 2
      %v871 = vsel %vm456, %v845, %v855
      %v872 = vsel %vm460, %v845, %v855
      %v874 = vrot.slane %v872, 2
      %v877 = vsel %vm456, %v846, %v856
      %v878 = vsel %vm460, %v846, %v856
      %v880 = vrot.slane %v878, 2
      %v881 = vshrl.u32 %v859, 16
      %v883 = vrot.slane %v881, 6
      %v884 = vshll.u32 %v859, 16
      %v886 = vrot.slane %v884, 7
      %v887 = vor.u32 %v883, %v886
      %v888 = vrot.slane %v887, 2
      %v890 = vshll.u32 %v862, 16
      %v892 = vrot.slane %v890, 7
      %v893 = vsel %vm488, %v888, %v892
      %v894 = vshrl.u32 %v865, 16
      %v896 = vrot.slane %v894, 6
      %v897 = vshll.u32 %v865, 16
      %v899 = vrot.slane %v897, 7
      %v900 = vor.u32 %v896, %v899
      %v901 = vrot.slane %v900, 2
      %v903 = vshll.u32 %v868, 16
      %v905 = vrot.slane %v903, 7
      %v906 = vsel %vm488, %v901, %v905
      %v907 = vshrl.u32 %v871, 16
      %v909 = vrot.slane %v907, 6
      %v910 = vshll.u32 %v871, 16
      %v912 = vrot.slane %v910, 7
      %v913 = vor.u32 %v909, %v912
      %v914 = vrot.slane %v913, 2
      %v916 = vshll.u32 %v874, 16
      %v918 = vrot.slane %v916, 7
      %v919 = vsel %vm488, %v914, %v918
      %v920 = vshrl.u32 %v877, 16
      %v922 = vrot.slane %v920, 6
      %v923 = vshll.u32 %v877, 16
      %v925 = vrot.slane %v923, 7
      %v926 = vor.u32 %v922, %v925
      %v927 = vrot.slane %v926, 2
      %v929 = vshll.u32 %v880, 16
      %v931 = vrot.slane %v929, 7
      %v932 = vsel %vm488, %v927, %v931
      %s933 = scalar_lea.vmem %s224, 320
      %v934 = vld [vmem:[%s933] sm:$0xf]
      %v935 = vld [vmem:[%s933 + $0x4] sm:$0xf]
      %v936 = vld [vmem:[%s933 + $0x8] sm:$0xf]
      %v937 = vld [vmem:[%s933 + $0xc] sm:$0xf]
      %v938 = vld [vmem:[%s933 + $0x10] sm:$0xf]
      %v939 = vld [vmem:[%s933 + $0x14] sm:$0xf]
      %v940 = vld [vmem:[%s933 + $0x18] sm:$0xf]
      %v941 = vld [vmem:[%s933 + $0x1c] sm:$0xf]
      %v942 = vld [vmem:[%s933 + $0x20] sm:$0xf]
      %v943 = vld [vmem:[%s933 + $0x24] sm:$0xf]
      %v944 = vld [vmem:[%s933 + $0x28] sm:$0xf]
      %v945 = vld [vmem:[%s933 + $0x2c] sm:$0xf]
      %v946 = vld [vmem:[%s933 + $0x30] sm:$0xf]
      %v947 = vld [vmem:[%s933 + $0x34] sm:$0xf]
      %v948 = vld [vmem:[%s933 + $0x38] sm:$0xf]
      %v949 = vld [vmem:[%s933 + $0x3c] sm:$0xf]
      %951 = vst [vmem:[#allocation1] ss:$4 sm:$0xff] %v893
      %s953 = scalar_lea.vmem [#allocation1], 1
      %954 = vst [vmem:[%s953] ss:$4 sm:$0xff] %v906
      %s956 = scalar_lea.vmem [#allocation1], 2
      %957 = vst [vmem:[%s956] ss:$4 sm:$0xff] %v919
      %s959 = scalar_lea.vmem [#allocation1], 3
      %960 = vst [vmem:[%s959] ss:$4 sm:$0xff] %v932
      %v961 = vld.sshfl [vmem:[#allocation1] sm:$0xff pattern:$0x73625140]
      %v979 = vunpack.c.l.b16 %v934
      %v980 = vunpack.c.l.b16 %v935
      %v981 = vunpack.c.l.b16 %v936
      %v982 = vunpack.c.l.b16 %v937
      %v983 = vunpack.c.l.b16 %v938
      %v984 = vunpack.c.l.b16 %v939
      %v985 = vunpack.c.l.b16 %v940
      %v986 = vunpack.c.l.b16 %v941
      %v987 = vunpack.c.l.b16 %v942
      %v988 = vunpack.c.l.b16 %v943
      %v989 = vunpack.c.l.b16 %v944
      %v990 = vunpack.c.l.b16 %v945
      %v991 = vunpack.c.l.b16 %v946
      %v992 = vunpack.c.l.b16 %v947
      %v993 = vunpack.c.l.b16 %v948
      %v994 = vunpack.c.l.b16 %v949
      %v995 = vpack.c.b16 %v980, %v979
      %v996 = vpack.c.b16 %v982, %v981
      %v997 = vpack.c.b16 %v984, %v983
      %v998 = vpack.c.b16 %v986, %v985
      %v999 = vpack.c.b16 %v988, %v987
      %v1000 = vpack.c.b16 %v990, %v989
      %v1001 = vpack.c.b16 %v992, %v991
      %v1002 = vpack.c.b16 %v994, %v993
      %1011 = vmatpush.bf16.msra.mxu0 %v1002
      %1012 = vmatpush.bf16.msra.mxu0 %v1001
      %1013 = vmatpush.bf16.msra.mxu0 %v1000
      %1014 = vmatpush.bf16.msra.mxu0 %v999
      %1015 = vmatpush.bf16.msra.mxu0 %v998
      %1016 = vmatpush.bf16.msra.mxu0 %v997
      %1017 = vmatpush.bf16.msra.mxu0 %v996
      %1018 = vmatpush.bf16.msra.mxu0 %v995
      %1019 = vmatmul.bf16.gmra.mxu0 %v961
      %v1020 = vpop.f32.mrf.mxu0
      %v1021 = vadd.f32 0.0, %v1020
      %v1022 = vpop.f32.mrf.mxu0
      %v1023 = vadd.f32 0.0, %v1022
      %1024 = vdwg.mxu0
      %v1025 = vadd.f32 %v847, %v1021
      %v1026 = vadd.f32 %v848, %v1023
      %1027 = vst [vmem:[#allocation2] sm:$0xff] %v1025
      %1028 = vst [vmem:[#allocation2 + $0x8] sm:$0xff] %v1026
      %s1029 = scalar_lea.vmem %s219, 4
      %v1030 = vld [vmem:[%s1029] sm:$0x3]
      %v1031 = vld [vmem:[%s1029 + $0x4] sm:$0x3]
      %v1032 = vld [vmem:[%s1029 + $0x8] sm:$0x3]
      %v1033 = vld [vmem:[%s1029 + $0xc] sm:$0x3]
      %v1034 = vld [vmem:[#allocation2] sm:$0xff]
      %v1035 = vld [vmem:[#allocation2 + $0x8] sm:$0xff]
      %s1036 = scalar_lea.vmem %s224, 384
      %v1037 = vld [vmem:[%s1036] sm:$0xf]
      %v1038 = vld [vmem:[%s1036 + $0x4] sm:$0xf]
      %v1039 = vld [vmem:[%s1036 + $0x8] sm:$0xf]
      %v1040 = vld [vmem:[%s1036 + $0xc] sm:$0xf]
      %v1041 = vld [vmem:[%s1036 + $0x10] sm:$0xf]
      %v1042 = vld [vmem:[%s1036 + $0x14] sm:$0xf]
      %v1043 = vld [vmem:[%s1036 + $0x18] sm:$0xf]
      %v1044 = vld [vmem:[%s1036 + $0x1c] sm:$0xf]
      %v1045 = vld [vmem:[%s1036 + $0x20] sm:$0xf]
      %v1046 = vld [vmem:[%s1036 + $0x24] sm:$0xf]
      %v1047 = vld [vmem:[%s1036 + $0x28] sm:$0xf]
      %v1048 = vld [vmem:[%s1036 + $0x2c] sm:$0xf]
      %v1049 = vld [vmem:[%s1036 + $0x30] sm:$0xf]
      %v1050 = vld [vmem:[%s1036 + $0x34] sm:$0xf]
      %v1051 = vld [vmem:[%s1036 + $0x38] sm:$0xf]
      %v1052 = vld [vmem:[%s1036 + $0x3c] sm:$0xf]
      %1054 = vst [vmem:[#allocation1] ss:$4 sm:$0xff] %v1030
      %s1056 = scalar_lea.vmem [#allocation1], 1
      %1057 = vst [vmem:[%s1056] ss:$4 sm:$0xff] %v1031
      %s1059 = scalar_lea.vmem [#allocation1], 2
      %1060 = vst [vmem:[%s1059] ss:$4 sm:$0xff] %v1032
      %s1062 = scalar_lea.vmem [#allocation1], 3
      %1063 = vst [vmem:[%s1062] ss:$4 sm:$0xff] %v1033
      %v1064 = vld.sshfl [vmem:[#allocation1] sm:$0xff pattern:$0x73625140]
      %v1082 = vunpack.c.l.b16 %v1037
      %v1083 = vunpack.c.l.b16 %v1038
      %v1084 = vunpack.c.l.b16 %v1039
      %v1085 = vunpack.c.l.b16 %v1040
      %v1086 = vunpack.c.l.b16 %v1041
      %v1087 = vunpack.c.l.b16 %v1042
      %v1088 = vunpack.c.l.b16 %v1043
      %v1089 = vunpack.c.l.b16 %v1044
      %v1090 = vunpack.c.l.b16 %v1045
      %v1091 = vunpack.c.l.b16 %v1046
      %v1092 = vunpack.c.l.b16 %v1047
      %v1093 = vunpack.c.l.b16 %v1048
      %v1094 = vunpack.c.l.b16 %v1049
      %v1095 = vunpack.c.l.b16 %v1050
      %v1096 = vunpack.c.l.b16 %v1051
      %v1097 = vunpack.c.l.b16 %v1052
      %v1098 = vpack.c.b16 %v1083, %v1082
      %v1099 = vpack.c.b16 %v1085, %v1084
      %v1100 = vpack.c.b16 %v1087, %v1086
      %v1101 = vpack.c.b16 %v1089, %v1088
      %v1102 = vpack.c.b16 %v1091, %v1090
      %v1103 = vpack.c.b16 %v1093, %v1092
      %v1104 = vpack.c.b16 %v1095, %v1094
      %v1105 = vpack.c.b16 %v1097, %v1096
      %1114 = vmatpush.bf16.msra.mxu0 %v1105
      %1115 = vmatpush.bf16.msra.mxu0 %v1104
      %1116 = vmatpush.bf16.msra.mxu0 %v1103
      %1117 = vmatpush.bf16.msra.mxu0 %v1102
      %1118 = vmatpush.bf16.msra.mxu0 %v1101
      %1119 = vmatpush.bf16.msra.mxu0 %v1100
      %1120 = vmatpush.bf16.msra.mxu0 %v1099
      %1121 = vmatpush.bf16.msra.mxu0 %v1098
      %1122 = vmatmul.bf16.gmra.mxu0 %v1064
      %v1123 = vpop.f32.mrf.mxu0
      %v1124 = vadd.f32 0.0, %v1123
      %v1125 = vpop.f32.mrf.mxu0
      %v1126 = vadd.f32 0.0, %v1125
      %1127 = vdwg.mxu0
      %v1128 = vadd.f32 %v1034, %v1124
      %v1129 = vadd.f32 %v1035, %v1126
      %1130 = vst [vmem:[#allocation2] sm:$0xff] %v1128
      %1131 = vst [vmem:[#allocation2 + $0x8] sm:$0xff] %v1129
      %s1132 = scalar_lea.vmem %s219, 24
      %v1133 = vld [vmem:[%s1132] sm:$0x3]
      %v1134 = vld [vmem:[%s1132 + $0x4] sm:$0x3]
      %v1135 = vld [vmem:[%s1132 + $0x8] sm:$0x3]
      %v1136 = vld [vmem:[%s1132 + $0xc] sm:$0x3]
      %v1137 = vld [vmem:[#allocation2] sm:$0xff]
      %v1138 = vld [vmem:[#allocation2 + $0x8] sm:$0xff]
      %s1139 = scalar_lea.vmem %s224, 448
      %v1140 = vld [vmem:[%s1139] sm:$0xf]
      %v1141 = vld [vmem:[%s1139 + $0x4] sm:$0xf]
      %v1142 = vld [vmem:[%s1139 + $0x8] sm:$0xf]
      %v1143 = vld [vmem:[%s1139 + $0xc] sm:$0xf]
      %v1144 = vld [vmem:[%s1139 + $0x10] sm:$0xf]
      %v1145 = vld [vmem:[%s1139 + $0x14] sm:$0xf]
      %v1146 = vld [vmem:[%s1139 + $0x18] sm:$0xf]
      %v1147 = vld [vmem:[%s1139 + $0x1c] sm:$0xf]
      %v1148 = vld [vmem:[%s1139 + $0x20] sm:$0xf]
      %v1149 = vld [vmem:[%s1139 + $0x24] sm:$0xf]
      %v1150 = vld [vmem:[%s1139 + $0x28] sm:$0xf]
      %v1151 = vld [vmem:[%s1139 + $0x2c] sm:$0xf]
      %v1152 = vld [vmem:[%s1139 + $0x30] sm:$0xf]
      %v1153 = vld [vmem:[%s1139 + $0x34] sm:$0xf]
      %v1154 = vld [vmem:[%s1139 + $0x38] sm:$0xf]
      %v1155 = vld [vmem:[%s1139 + $0x3c] sm:$0xf]
      %1157 = vst [vmem:[#allocation1] ss:$4 sm:$0xff] %v1133
      %s1159 = scalar_lea.vmem [#allocation1], 1
      %1160 = vst [vmem:[%s1159] ss:$4 sm:$0xff] %v1134
      %s1162 = scalar_lea.vmem [#allocation1], 2
      %1163 = vst [vmem:[%s1162] ss:$4 sm:$0xff] %v1135
      %s1165 = scalar_lea.vmem [#allocation1], 3
      %1166 = vst [vmem:[%s1165] ss:$4 sm:$0xff] %v1136
      %v1167 = vld.sshfl [vmem:[#allocation1] sm:$0xff pattern:$0x73625140]
      %v1185 = vunpack.c.l.b16 %v1140
      %v1186 = vunpack.c.l.b16 %v1141
      %v1187 = vunpack.c.l.b16 %v1142
      %v1188 = vunpack.c.l.b16 %v1143
      %v1189 = vunpack.c.l.b16 %v1144
      %v1190 = vunpack.c.l.b16 %v1145
      %v1191 = vunpack.c.l.b16 %v1146
      %v1192 = vunpack.c.l.b16 %v1147
      %v1193 = vunpack.c.l.b16 %v1148
      %v1194 = vunpack.c.l.b16 %v1149
      %v1195 = vunpack.c.l.b16 %v1150
      %v1196 = vunpack.c.l.b16 %v1151
      %v1197 = vunpack.c.l.b16 %v1152
      %v1198 = vunpack.c.l.b16 %v1153
      %v1199 = vunpack.c.l.b16 %v1154
      %v1200 = vunpack.c.l.b16 %v1155
      %v1201 = vpack.c.b16 %v1186, %v1185
      %v1202 = vpack.c.b16 %v1188, %v1187
      %v1203 = vpack.c.b16 %v1190, %v1189
      %v1204 = vpack.c.b16 %v1192, %v1191
      %v1205 = vpack.c.b16 %v1194, %v1193
      %v1206 = vpack.c.b16 %v1196, %v1195
      %v1207 = vpack.c.b16 %v1198, %v1197
      %v1208 = vpack.c.b16 %v1200, %v1199
      %1217 = vmatpush.bf16.msra.mxu0 %v1208
      %1218 = vmatpush.bf16.msra.mxu0 %v1207
      %1219 = vmatpush.bf16.msra.mxu0 %v1206
      %1220 = vmatpush.bf16.msra.mxu0 %v1205
      %1221 = vmatpush.bf16.msra.mxu0 %v1204
      %1222 = vmatpush.bf16.msra.mxu0 %v1203
      %1223 = vmatpush.bf16.msra.mxu0 %v1202
      %1224 = vmatpush.bf16.msra.mxu0 %v1201
      %1225 = vmatmul.bf16.gmra.mxu0 %v1167
      %v1226 = vpop.f32.mrf.mxu0
      %v1227 = vadd.f32 0.0, %v1226
      %v1228 = vpop.f32.mrf.mxu0
      %v1229 = vadd.f32 0.0, %v1228
      %1230 = vdwg.mxu0
      %v1231 = vadd.f32 %v1137, %v1227
      %v1232 = vadd.f32 %v1138, %v1229
      %1233 = vst [vmem:[#allocation2] sm:$0xff] %v1231
      %1234 = vst [vmem:[#allocation2 + $0x8] sm:$0xff] %v1232
      %v1235 = vld [vmem:[%s1029] sm:$0x7]
      %v1236 = vld [vmem:[%s1029 + $0x4] sm:$0x7]
      %v1237 = vld [vmem:[%s1029 + $0x8] sm:$0x7]
      %v1238 = vld [vmem:[%s1029 + $0xc] sm:$0x7]
      %v1239 = vld [vmem:[#allocation2] sm:$0xff]
      %v1240 = vld [vmem:[#allocation2 + $0x8] sm:$0xff]
      %v1245 = vrot.slane %v1235, 2
      %v1246 = vrot.slane %v1236, 2
      %v1247 = vrot.slane %v1237, 2
      %v1248 = vrot.slane %v1238, 2
      %v1251 = vsel %vm456, %v1235, %v1245
      %v1252 = vsel %vm460, %v1235, %v1245
      %v1254 = vrot.slane %v1252, 2
      %v1257 = vsel %vm456, %v1236, %v1246
      %v1258 = vsel %vm460, %v1236, %v1246
      %v1260 = vrot.slane %v1258, 2
      %v1263 = vsel %vm456, %v1237, %v1247
      %v1264 = vsel %vm460, %v1237, %v1247
      %v1266 = vrot.slane %v1264, 2
      %v1269 = vsel %vm456, %v1238, %v1248
      %v1270 = vsel %vm460, %v1238, %v1248
      %v1272 = vrot.slane %v1270, 2
      %v1273 = vshrl.u32 %v1251, 16
      %v1275 = vrot.slane %v1273, 6
      %v1276 = vshll.u32 %v1251, 16
      %v1278 = vrot.slane %v1276, 7
      %v1279 = vor.u32 %v1275, %v1278
      %v1280 = vrot.slane %v1279, 2
      %v1282 = vshll.u32 %v1254, 16
      %v1284 = vrot.slane %v1282, 7
      %v1285 = vsel %vm488, %v1280, %v1284
      %v1286 = vshrl.u32 %v1257, 16
      %v1288 = vrot.slane %v1286, 6
      %v1289 = vshll.u32 %v1257, 16
      %v1291 = vrot.slane %v1289, 7
      %v1292 = vor.u32 %v1288, %v1291
      %v1293 = vrot.slane %v1292, 2
      %v1295 = vshll.u32 %v1260, 16
      %v1297 = vrot.slane %v1295, 7
      %v1298 = vsel %vm488, %v1293, %v1297
      %v1299 = vshrl.u32 %v1263, 16
      %v1301 = vrot.slane %v1299, 6
      %v1302 = vshll.u32 %v1263, 16
      %v1304 = vrot.slane %v1302, 7
      %v1305 = vor.u32 %v1301, %v1304
      %v1306 = vrot.slane %v1305, 2
      %v1308 = vshll.u32 %v1266, 16
      %v1310 = vrot.slane %v1308, 7
      %v1311 = vsel %vm488, %v1306, %v1310
      %v1312 = vshrl.u32 %v1269, 16
      %v1314 = vrot.slane %v1312, 6
      %v1315 = vshll.u32 %v1269, 16
      %v1317 = vrot.slane %v1315, 7
      %v1318 = vor.u32 %v1314, %v1317
      %v1319 = vrot.slane %v1318, 2
      %v1321 = vshll.u32 %v1272, 16
      %v1323 = vrot.slane %v1321, 7
      %v1324 = vsel %vm488, %v1319, %v1323
      %s1325 = scalar_lea.vmem %s224, 512
      %v1326 = vld [vmem:[%s1325] sm:$0xf]
      %v1327 = vld [vmem:[%s1325 + $0x4] sm:$0xf]
      %v1328 = vld [vmem:[%s1325 + $0x8] sm:$0xf]
      %v1329 = vld [vmem:[%s1325 + $0xc] sm:$0xf]
      %v1330 = vld [vmem:[%s1325 + $0x10] sm:$0xf]
      %v1331 = vld [vmem:[%s1325 + $0x14] sm:$0xf]
      %v1332 = vld [vmem:[%s1325 + $0x18] sm:$0xf]
      %v1333 = vld [vmem:[%s1325 + $0x1c] sm:$0xf]
      %v1334 = vld [vmem:[%s1325 + $0x20] sm:$0xf]
      %v1335 = vld [vmem:[%s1325 + $0x24] sm:$0xf]
      %v1336 = vld [vmem:[%s1325 + $0x28] sm:$0xf]
      %v1337 = vld [vmem:[%s1325 + $0x2c] sm:$0xf]
      %v1338 = vld [vmem:[%s1325 + $0x30] sm:$0xf]
      %v1339 = vld [vmem:[%s1325 + $0x34] sm:$0xf]
      %v1340 = vld [vmem:[%s1325 + $0x38] sm:$0xf]
      %v1341 = vld [vmem:[%s1325 + $0x3c] sm:$0xf]
      %1343 = vst [vmem:[#allocation1] ss:$4 sm:$0xff] %v1285
      %s1345 = scalar_lea.vmem [#allocation1], 1
      %1346 = vst [vmem:[%s1345] ss:$4 sm:$0xff] %v1298
      %s1348 = scalar_lea.vmem [#allocation1], 2
      %1349 = vst [vmem:[%s1348] ss:$4 sm:$0xff] %v1311
      %s1351 = scalar_lea.vmem [#allocation1], 3
      %1352 = vst [vmem:[%s1351] ss:$4 sm:$0xff] %v1324
      %v1353 = vld.sshfl [vmem:[#allocation1] sm:$0xff pattern:$0x73625140]
      %v1371 = vunpack.c.l.b16 %v1326
      %v1372 = vunpack.c.l.b16 %v1327
      %v1373 = vunpack.c.l.b16 %v1328
      %v1374 = vunpack.c.l.b16 %v1329
      %v1375 = vunpack.c.l.b16 %v1330
      %v1376 = vunpack.c.l.b16 %v1331
      %v1377 = vunpack.c.l.b16 %v1332
      %v1378 = vunpack.c.l.b16 %v1333
      %v1379 = vunpack.c.l.b16 %v1334
      %v1380 = vunpack.c.l.b16 %v1335
      %v1381 = vunpack.c.l.b16 %v1336
      %v1382 = vunpack.c.l.b16 %v1337
      %v1383 = vunpack.c.l.b16 %v1338
      %v1384 = vunpack.c.l.b16 %v1339
      %v1385 = vunpack.c.l.b16 %v1340
      %v1386 = vunpack.c.l.b16 %v1341
      %v1387 = vpack.c.b16 %v1372, %v1371
      %v1388 = vpack.c.b16 %v1374, %v1373
      %v1389 = vpack.c.b16 %v1376, %v1375
      %v1390 = vpack.c.b16 %v1378, %v1377
      %v1391 = vpack.c.b16 %v1380, %v1379
      %v1392 = vpack.c.b16 %v1382, %v1381
      %v1393 = vpack.c.b16 %v1384, %v1383
      %v1394 = vpack.c.b16 %v1386, %v1385
      %1403 = vmatpush.bf16.msra.mxu0 %v1394
      %1404 = vmatpush.bf16.msra.mxu0 %v1393
      %1405 = vmatpush.bf16.msra.mxu0 %v1392
      %1406 = vmatpush.bf16.msra.mxu0 %v1391
      %1407 = vmatpush.bf16.msra.mxu0 %v1390
      %1408 = vmatpush.bf16.msra.mxu0 %v1389
      %1409 = vmatpush.bf16.msra.mxu0 %v1388
      %1410 = vmatpush.bf16.msra.mxu0 %v1387
      %1411 = vmatmul.bf16.gmra.mxu0 %v1353
      %v1412 = vpop.f32.mrf.mxu0
      %v1413 = vadd.f32 0.0, %v1412
      %v1414 = vpop.f32.mrf.mxu0
      %v1415 = vadd.f32 0.0, %v1414
      %1416 = vdwg.mxu0
      %v1417 = vadd.f32 %v1239, %v1413
      %v1418 = vadd.f32 %v1240, %v1415
      %1419 = vst [vmem:[#allocation2] sm:$0xff] %v1417
      %1420 = vst [vmem:[#allocation2 + $0x8] sm:$0xff] %v1418
      %v1421 = vld [vmem:[#allocation2] sm:$0xff]
      %v1422 = vld [vmem:[#allocation2 + $0x8] sm:$0xff]
      %v1423 = vld [vmem:[%s227] sm:$0x1]
      %v1425 = vperm.slane %v1423, 0
      %v1427 = vadd.f32 %v1421, %v1425
      %v1428 = vadd.f32 %v1422, %v1425
      %v1429 = vmax.f32 %v1427, 0.0
      %v1430 = vmax.f32 %v1428, 0.0
      %v1433 = vrot.slane %v1429, 4
      %v1434 = vrot.slane %v1430, 4
      %v1437 = vpack.c.bf16 %v1429, %v1429
      %v1438 = vpack.c.bf16 %v1433, %v1433
      %v1439 = vpack.c.bf16 %v1430, %v1430
      %v1440 = vpack.c.bf16 %v1434, %v1434
      %1441 = vst [vmem:[%s235] sm:$0x3] %v1437
      %1442 = vst [vmem:[%s235 + $0x2] sm:$0x3] %v1438
      %1443 = vst [vmem:[%s235 + $0x4] sm:$0x3] %v1439
      %1444 = vst [vmem:[%s235 + $0x6] sm:$0x3] %v1440
      %p1445 = scmp.lt.s32.totalorder %s18, 1
      %s1446 = scalar_select %p1445, %s18, 1
      %p1447 = scmp.lt.s32.totalorder %s19, 0
      %s1448 = scalar_select %p1447, %s19, 0
      %s1449 = smul.addr %s1446, 4
      %s1450 = sadd.s32 %s1448, %s1449
      %s1451 = smul.addr %s1450, 2
      %s1452 = scalar_lea.vmem %s3, %s1451
      // Predicated region
      $region33: #{_forward_impl.4} parent=31 // pred_check
        %p1453 = pneg %p126
      $region34: #{_forward_impl.4} parent=31 // pred_check_branch
        %1455 = sbr.rel (%p1453) target = $region36
      $region35: #{_forward_impl.4} parent=31 // pred_region
        _
      $region36: #{_forward_impl.4} parent=31 // pred_fallthru
        _
    $region32: #{_forward_impl.4} parent=5 // pred_fallthru
      _
    %p1456 = scmp.le.s32.totalorder 2, %s9
    // Predicated region
    $region37: #{_forward_impl.4} parent=5 // pred_check
      %p1457 = pneg %p1456
    $region38: #{_forward_impl.4} parent=5 // pred_check_branch
      %1459 = sbr.rel (%p1457) target = $region40
    $region39: #{_forward_impl.4} parent=5 // pred_region
      %s1460 = ssub.s32 %s9, 2
      // Predicated region
      $region41: #{_forward_impl.4} parent=39 // pred_check
        %p1461 = pneg %p132
      $region42: #{_forward_impl.4} parent=39 // pred_check_branch
        %1463 = sbr.rel (%p1461) target = $region44
      $region43: #{_forward_impl.4} parent=39 // pred_region
        %p1464 = scmp.lt.s32.totalorder %s20, 1
        %s1465 = scalar_select %p1464, %s20, 1
        %p1466 = scmp.lt.s32.totalorder %s21, 0
        %s1467 = scalar_select %p1466, %s21, 0
        %s1468 = smul.addr %s1465, 4
        %s1469 = sadd.s32 %s1467, %s1468
        %s1470 = smul.addr %s1469, 2
        %s1471 = scalar_lea.vmem %s3, %s1470
      $region44: #{_forward_impl.4} parent=39 // pred_fallthru
        _
    $region40: #{_forward_impl.4} parent=5 // pred_fallthru
      _
  $region6: #{_forward_impl.4} parent=0 // loop_footer
    %s13 = sadd.s32 1, %s9
  $region7: #{_forward_impl.4} parent=0 // loop_footer_branch
    %8 = sbr.rel target = $region3
  $region8: #{_forward_impl.4} parent=0 // loop_exit
    _

</llo_original>
